<compile_context>
chip_gen: v5e
topology: v5e:2x2
jax: 0.10.0
libtpu: 0.0.40
codegen_flags: <defaults>
</compile_context>

<pallas_src>
import functools

import jax
import jax.numpy as jnp
from jax.experimental import pallas as pl
from jax.experimental.pallas import tpu as pltpu


def _upsample_nearest_kernel(x_ref, o_ref, *, scale):
    # x_ref: (R, W)   o_ref: (R, scale * W * scale)
    x = x_ref[...]
    r, w = x.shape
    # Stage 1 (lane axis): repeat each element `scale` times along W.
    y = jnp.broadcast_to(x[:, :, None], (r, w, scale)).reshape(r, w * scale)
    # Stage 2 (row replication, folded into the lanes of the contiguous output
    # view): each input row's `scale` identical output rows are just `scale`
    # copies of y placed side by side in the super-row.  Single full-width,
    # unmasked store.
    o_ref[...] = jnp.concatenate([y] * scale, axis=1)


def _choose_row_block(total_rows, w, scale, itemsize):
    """Pick the number of flattened input rows processed per grid step."""
    # Sublane alignment for the dtype (f32: 8, bf16: 16, int8/fp8: 32).
    sub = max(8, 32 // int(itemsize))
    if total_rows <= sub:
        return int(total_rows)  # full extent -> always a legal block shape

    bytes_per_row = w * itemsize * (1 + scale * scale)  # in row + its out rows
    target_bytes = 4 * 1024 * 1024  # ~4 MiB in+out per step (x2 double-buffered)
    r = max(sub, min(total_rows, target_bytes // bytes_per_row))
    r = (r // sub) * sub

    # Keep at least two grid steps so both v7x TensorCores get work.
    half = max(sub, ((total_rows // 2) // sub) * sub)
    r = min(r, half)

    # Prefer an exact divisor of total_rows (no masked edge block); otherwise
    # keep the aligned size and rely on Pallas edge masking (still correct:
    # the row mapping between input and output blocks is the identity).
    cand = r
    while cand > sub and total_rows % cand:
        cand -= sub
    if cand >= sub and total_rows % cand == 0:
        r = cand
    return int(r)


def upsample_nearest(x, scale_factor=2):
    """Nearest-neighbor upsampling of an NCHW tensor by an integer factor."""
    if isinstance(scale_factor, (tuple, list)):
        uniq = set(int(s) for s in scale_factor)
        if len(uniq) == 1 and all(float(s) == int(s) for s in scale_factor):
            scale_factor = uniq.pop()
        else:
            # TODO(synk): per-axis (non-uniform tuple) scale factors not implemented.
            raise NotImplementedError("non-uniform tuple scale_factor is not supported")
    if float(scale_factor) != int(scale_factor) or int(scale_factor) < 1:
        raise NotImplementedError("only positive integer scale factors are supported")
    s = int(scale_factor)
    if x.ndim != 4:
        raise NotImplementedError("only 4D NCHW inputs are supported")

    N, C, H, W = x.shape
    if s == 1:
        return x

    itemsize = jnp.dtype(x.dtype).itemsize
    total_rows = N * C * H
    R = _choose_row_block(total_rows, W, s, itemsize)
    grid = (pl.cdiv(total_rows, R),)

    x2d = x.reshape(total_rows, W)
    out_w = s * s * W  # super-row width (lane-dense for W >= 32 when s == 2)

    kernel = functools.partial(_upsample_nearest_kernel, scale=s)

    out2d = pl.pallas_call(
        kernel,
        out_shape=jax.ShapeDtypeStruct((total_rows, out_w), x.dtype),
        grid_spec=pltpu.PrefetchScalarGridSpec(
            num_scalar_prefetch=0,
            grid=grid,
            in_specs=[pl.BlockSpec((R, W), lambda i: (i, 0))],
            out_specs=pl.BlockSpec((R, out_w), lambda i: (i, 0)),
        ),
        compiler_params=pltpu.CompilerParams(
            dimension_semantics=("parallel",),
            vmem_limit_bytes=32 * 1024 * 1024,
        ),
        cost_estimate=pl.CostEstimate(
            flops=0,
            transcendentals=0,
            bytes_accessed=int((1 + s * s) * x.size * itemsize),
        ),
    )(x2d)

    # Contiguous (free) reshape back to NCHW.
    return out2d.reshape(N, C, H * s, W * s)


class Upsample:
    """JAX/Pallas equivalent of the PyTorch Upsample wrapper (mode='nearest')."""

    def __init__(self, scale_factor=2, mode="nearest"):
        if mode != "nearest":
            # TODO(synk): bilinear/bicubic (align_corners=False) not implemented.
            raise NotImplementedError("Only mode='nearest' is implemented.")
        self.scale_factor = scale_factor
        self.mode = mode

    def __call__(self, x):
        return upsample_nearest(x, self.scale_factor)


if __name__ == "__main__":
    key = jax.random.PRNGKey(0)
    x = jax.random.normal(key, (2, 4, 16, 16), dtype=jnp.float32)

    model = Upsample(scale_factor=2, mode="nearest")
    out = jax.block_until_ready(model(x))

    # Reference nearest upsampling (matches F.interpolate mode='nearest'):
    ref = jnp.repeat(jnp.repeat(x, 2, axis=2), 2, axis=3)
    assert out.shape == (2, 4, 32, 32), out.shape
    assert out.dtype == x.dtype
    assert jnp.array_equal(out, ref), "mismatch vs reference nearest upsampling"

    print("KERNEL_OK")
</pallas_src>

<mosaic_0001>
module attributes {stable_mosaic.version = 11 : i64} {
  func.func @_upsample_nearest_kernel(%arg0: i32, %arg1: memref<64x16xf32, #tpu.memory_space<vmem>>, %arg2: memref<64x64xf32, #tpu.memory_space<vmem>>) attributes {dimension_semantics = [#tpu.dimension_semantics<parallel>], iteration_bounds = array<i64: 2>, scalar_prefetch = 0 : i64, scratch_operands = 0 : i64, tpu.core_type = #tpu.core_type<tc>, window_params = [{transform_indices = @transform_0, window_bounds = array<i64: 64, 16>}, {transform_indices = @transform_1, window_bounds = array<i64: 64, 64>}]} {
    %c0 = arith.constant 0 : index
    %c0_0 = arith.constant 0 : index
    %0 = vector.load %arg1[%c0, %c0_0] : memref<64x16xf32, #tpu.memory_space<vmem>>, vector<64x16xf32>
    %1 = vector.shape_cast %0 : vector<64x16xf32> to vector<64x16x1xf32>
    %2 = vector.shape_cast %1 : vector<64x16x1xf32> to vector<64x16x1xf32>
    %3 = vector.broadcast %2 : vector<64x16x1xf32> to vector<64x16x2xf32>
    %4 = vector.shape_cast %3 : vector<64x16x2xf32> to vector<64x32xf32>
    %5 = tpu.concatenate %4, %4 in 1 : vector<64x32xf32>, vector<64x32xf32> -> vector<64x64xf32>
    %c0_1 = arith.constant 0 : index
    %c0_2 = arith.constant 0 : index
    %6 = vector.load %arg2[%c0_1, %c0_2] : memref<64x64xf32, #tpu.memory_space<vmem>>, vector<64x64xf32>
    tpu.vector_store %arg2[%c0_1, %c0_2], %5 {strides = array<i32>} : memref<64x64xf32, #tpu.memory_space<vmem>>, vector<64x64xf32>,
    return
  }
  func.func @transform_0(%arg0: i32) -> (i32, i32) {
    %c0_i32 = arith.constant 0 : i32
    %c0_i32_0 = arith.constant 0 : i32
    return %arg0, %c0_i32 : i32, i32
  }
  func.func @transform_1(%arg0: i32) -> (i32, i32) {
    %c0_i32 = arith.constant 0 : i32
    %c0_i32_0 = arith.constant 0 : i32
    return %arg0, %c0_i32 : i32, i32
  }
}

</mosaic_0001>

<llo_original>
// kernel: tpu_custom_call.1
$region0: #{tpu_custom_call.1}
  #allocation0 [shape = 'u32[]', space=smem, size = 0x4, offset = 0x4, fixed_abs, tag = 'smem constant byte address 0x4 - core index']
  #allocation1 [shape = 'u32[72,128]{1,0:T(1,128)}', space=vmem, size = 0x9000, scoped, tag = 'internal scratch']
  %s0 = inlined_call_operand.vmem [shape: f32[128,16], index: 0, kind: input, shape index: {}]
  %s1 = inlined_call_operand.vmem [shape: f32[128,64], index: 1, kind: output, shape index: {}]
  %s2 = sld [smem:[#allocation0]]
  $region37: #{tpu_custom_call.1} parent=0
    _
  %s4 = ssub.s32 1, %s2
  %s5 = scalar_select 0, %s4, %s2
  loop: start=0, step=1, limit=4
  $region2: #{tpu_custom_call.1} parent=0 // loop_pre_header
    _
  $region3: #{tpu_custom_call.1} parent=0 // loop_header
    %s7 = sphi 0, %s11
    %p8 = scmp.ge.s32.totalorder %s7, 4
    %s17 = sphi 0, %s19
    %s20 = sphi 0, %s17
    %s21 = sphi 0, %s20
    %s37 = sphi 0, %s21
    %s43 = sphi 0, %s45
    %s46 = sphi 0, %s43
    %s47 = sphi 0, %s46
    %s63 = sphi 0, %s47
  $region4: #{tpu_custom_call.1} parent=0 // loop_header_branch
    %10 = sbr.rel (%p8) target = $region8
  $region5: #{tpu_custom_call.1} parent=0 // loop_body
    %s12 = ssub.s32 %s7, 1
    %s13 = ssub.s32 %s7, 2
    %s14 = sadd.s32 %s7, 1
    %s15 = ssub.s32 %s7, %s14
    %p16 = scmp.eq.s32.totalorder %s15, 0
    %s18 = sadd.s32 %s17, 1
    %s19 = scalar_select %p16, %s17, %s18
    %p22 = pneg %p16
    %p23 = scmp.eq.s32.totalorder %s7, 1
    %p24 = por %p22, %p23
    %p25 = scmp.ne.s32.totalorder %s17, %s20
    %p26 = scmp.eq.s32.totalorder %s7, 0
    %p27 = por %p25, %p26
    %p28 = scmp.ne.s32.totalorder %s17, %s20
    %p29 = scmp.eq.s32.totalorder %s12, 1
    %p30 = por %p28, %p29
    %p31 = scmp.ne.s32.totalorder %s20, %s21
    %p32 = scmp.eq.s32.totalorder %s12, 0
    %p33 = por %p31, %p32
    %p34 = scmp.ne.s32.totalorder %s20, %s21
    %p35 = scmp.eq.s32.totalorder %s13, 1
    %p36 = por %p34, %p35
    %p38 = scmp.ne.s32.totalorder %s21, %s37
    %p39 = scmp.eq.s32.totalorder %s13, 0
    %p40 = por %p38, %p39
    %s41 = ssub.s32 %s7, %s14
    %p42 = scmp.eq.s32.totalorder %s41, 0
    %s44 = sadd.s32 %s43, 1
    %s45 = scalar_select %p42, %s43, %s44
    %p48 = pneg %p42
    %p49 = scmp.eq.s32.totalorder %s7, 1
    %p50 = por %p48, %p49
    %p51 = scmp.ne.s32.totalorder %s43, %s46
    %p52 = scmp.eq.s32.totalorder %s7, 0
    %p53 = por %p51, %p52
    %p54 = scmp.ne.s32.totalorder %s43, %s46
    %p55 = scmp.eq.s32.totalorder %s12, 1
    %p56 = por %p54, %p55
    %p57 = scmp.ne.s32.totalorder %s46, %s47
    %p58 = scmp.eq.s32.totalorder %s12, 0
    %p59 = por %p57, %p58
    %p60 = scmp.ne.s32.totalorder %s46, %s47
    %p61 = scmp.eq.s32.totalorder %s13, 1
    %p62 = por %p60, %p61
    %p64 = scmp.ne.s32.totalorder %s47, %s63
    %p65 = scmp.eq.s32.totalorder %s13, 0
    %p66 = por %p64, %p65
    %p67 = scmp.le.s32.totalorder 1, %s7
    %p68 = scmp.lt.s32.totalorder %s7, 3
    %p69 = pnand %p67, %p68
    %p70 = pneg %p69
    // Predicated region
    $region9: #{tpu_custom_call.1} parent=5 // pred_check
      _
    $region10: #{tpu_custom_call.1} parent=5 // pred_check_branch
      %72 = sbr.rel (%p69) target = $region12
    $region11: #{tpu_custom_call.1} parent=5 // pred_region
      %s73 = ssub.s32 %s7, 1
    $region12: #{tpu_custom_call.1} parent=5 // pred_fallthru
      _
    %p74 = scmp.lt.s32.totalorder %s7, 2
    // Predicated region
    $region13: #{tpu_custom_call.1} parent=5 // pred_check
      %p75 = pneg %p74
    $region14: #{tpu_custom_call.1} parent=5 // pred_check_branch
      %77 = sbr.rel (%p75) target = $region16
    $region15: #{tpu_custom_call.1} parent=5 // pred_region
      // Predicated region
      $region17: #{tpu_custom_call.1} parent=15 // pred_check
        %p78 = pneg %p27
      $region18: #{tpu_custom_call.1} parent=15 // pred_check_branch
        %80 = sbr.rel (%p78) target = $region20
      $region19: #{tpu_custom_call.1} parent=15 // pred_region
        %s81 = smul.u32 8, %s7
        %p82 = scmp.lt.s32.totalorder %s81, 15
        %s83 = scalar_select %p82, %s81, 15
        %s84 = smul.addr %s83, 8
        %s85 = scalar_lea.vmem %s0, %s84
        %s86 = smul.u32 8, %s7
      $region20: #{tpu_custom_call.1} parent=15 // pred_fallthru
        _
    $region16: #{tpu_custom_call.1} parent=5 // pred_fallthru
      _
    %p87 = scmp.le.s32.totalorder 1, %s7
    %p88 = scmp.lt.s32.totalorder %s7, 3
    %p89 = pnand %p87, %p88
    %p90 = pneg %p89
    // Predicated region
    $region21: #{tpu_custom_call.1} parent=5 // pred_check
      _
    $region22: #{tpu_custom_call.1} parent=5 // pred_check_branch
      %92 = sbr.rel (%p89) target = $region24
    $region23: #{tpu_custom_call.1} parent=5 // pred_region
      %s93 = ssub.s32 %s7, 1
      %s94 = smul.u32 8, %s12
      %p95 = scmp.lt.s32.totalorder %s94, 15
      %s96 = scalar_select %p95, %s94, 15
      %s97 = smul.addr %s96, 8
      %s98 = scalar_lea.vmem %s0, %s97
      %p99 = pneg %p33
      %p100 = pneg %p30
      %p101 = pneg %p59
      %p102 = pneg %p56
      %s103 = smul.u32 8, %s12
      %p104 = scmp.lt.s32.totalorder %s103, 15
      %s105 = scalar_select %p104, %s103, 15
      %s106 = smul.addr %s105, 8
      %s107 = scalar_lea.vmem %s1, %s106
      %s108 = smul.u32 8, %s12
      %p109 = scmp.lt.s32.totalorder %s108, 15
      %s110 = scalar_select %p109, %s108, 15
      %s111 = smul.addr %s110, 8
      %s112 = scalar_lea.vmem %s0, %s111
      %s113 = smul.u32 8, %s12
      %s114 = smul.u32 8, %s12
      %p115 = scmp.lt.s32.totalorder %s114, 15
      %s116 = scalar_select %p115, %s114, 15
      %s117 = smul.addr %s116, 8
      %s118 = scalar_lea.vmem %s1, %s117
      %s119 = smul.u32 8, %s12
      %v120 = vld [vmem:[%s112] sm:$0xff]
      %v121 = vld [vmem:[%s112 + $0x8] sm:$0xff]
      %v122 = vld [vmem:[%s112 + $0x10] sm:$0xff]
      %v123 = vld [vmem:[%s112 + $0x18] sm:$0xff]
      %v124 = vld [vmem:[%s112 + $0x20] sm:$0xff]
      %v125 = vld [vmem:[%s112 + $0x28] sm:$0xff]
      %v126 = vld [vmem:[%s112 + $0x30] sm:$0xff]
      %v127 = vld [vmem:[%s112 + $0x38] sm:$0xff]
      %v128 = vperm.slane %v120, 0
      %v129 = vlaneseq
      %v130 = vshrl.u32 %v129, 7
      %132 = vset.pattern.permute.xlu0 %v130
      %133 = vperm.xlu0 %132, %v128
      %v134 = vpop.permute.xlu0 %133
      %v135 = vlaneseq
      %v136 = vshrl.u32 %v135, 7
      %v137 = vadd.s32 %v136, 8
      %138 = vset.pattern.permute.xlu0 %v137
      %139 = vperm.xlu0 %138, %v128
      %v140 = vpop.permute.xlu0 %139
      %v141 = vperm.slane %v120, 1
      %v142 = vlaneseq
      %v143 = vshrl.u32 %v142, 7
      %145 = vset.pattern.permute.xlu0 %v143
      %146 = vperm.xlu0 %145, %v141
      %v147 = vpop.permute.xlu0 %146
      %v148 = vlaneseq
      %v149 = vshrl.u32 %v148, 7
      %v150 = vadd.s32 %v149, 8
      %151 = vset.pattern.permute.xlu0 %v150
      %152 = vperm.xlu0 %151, %v141
      %v153 = vpop.permute.xlu0 %152
      %v154 = vperm.slane %v120, 2
      %v155 = vlaneseq
      %v156 = vshrl.u32 %v155, 7
      %158 = vset.pattern.permute.xlu0 %v156
      %159 = vperm.xlu0 %158, %v154
      %v160 = vpop.permute.xlu0 %159
      %v161 = vlaneseq
      %v162 = vshrl.u32 %v161, 7
      %v163 = vadd.s32 %v162, 8
      %164 = vset.pattern.permute.xlu0 %v163
      %165 = vperm.xlu0 %164, %v154
      %v166 = vpop.permute.xlu0 %165
      %v167 = vperm.slane %v120, 3
      %v168 = vlaneseq
      %v169 = vshrl.u32 %v168, 7
      %171 = vset.pattern.permute.xlu0 %v169
      %172 = vperm.xlu0 %171, %v167
      %v173 = vpop.permute.xlu0 %172
      %v174 = vlaneseq
      %v175 = vshrl.u32 %v174, 7
      %v176 = vadd.s32 %v175, 8
      %177 = vset.pattern.permute.xlu0 %v176
      %178 = vperm.xlu0 %177, %v167
      %v179 = vpop.permute.xlu0 %178
      %v180 = vperm.slane %v120, 4
      %v181 = vlaneseq
      %v182 = vshrl.u32 %v181, 7
      %184 = vset.pattern.permute.xlu0 %v182
      %185 = vperm.xlu0 %184, %v180
      %v186 = vpop.permute.xlu0 %185
      %v187 = vlaneseq
      %v188 = vshrl.u32 %v187, 7
      %v189 = vadd.s32 %v188, 8
      %190 = vset.pattern.permute.xlu0 %v189
      %191 = vperm.xlu0 %190, %v180
      %v192 = vpop.permute.xlu0 %191
      %v193 = vperm.slane %v120, 5
      %v194 = vlaneseq
      %v195 = vshrl.u32 %v194, 7
      %197 = vset.pattern.permute.xlu0 %v195
      %198 = vperm.xlu0 %197, %v193
      %v199 = vpop.permute.xlu0 %198
      %v200 = vlaneseq
      %v201 = vshrl.u32 %v200, 7
      %v202 = vadd.s32 %v201, 8
      %203 = vset.pattern.permute.xlu0 %v202
      %204 = vperm.xlu0 %203, %v193
      %v205 = vpop.permute.xlu0 %204
      %v206 = vperm.slane %v120, 6
      %v207 = vlaneseq
      %v208 = vshrl.u32 %v207, 7
      %210 = vset.pattern.permute.xlu0 %v208
      %211 = vperm.xlu0 %210, %v206
      %v212 = vpop.permute.xlu0 %211
      %v213 = vlaneseq
      %v214 = vshrl.u32 %v213, 7
      %v215 = vadd.s32 %v214, 8
      %216 = vset.pattern.permute.xlu0 %v215
      %217 = vperm.xlu0 %216, %v206
      %v218 = vpop.permute.xlu0 %217
      %v219 = vperm.slane %v120, 7
      %v220 = vlaneseq
      %v221 = vshrl.u32 %v220, 7
      %223 = vset.pattern.permute.xlu0 %v221
      %224 = vperm.xlu0 %223, %v219
      %v225 = vpop.permute.xlu0 %224
      %v226 = vlaneseq
      %v227 = vshrl.u32 %v226, 7
      %v228 = vadd.s32 %v227, 8
      %229 = vset.pattern.permute.xlu0 %v228
      %230 = vperm.xlu0 %229, %v219
      %v231 = vpop.permute.xlu0 %230
      %v232 = vperm.slane %v121, 0
      %v233 = vlaneseq
      %v234 = vshrl.u32 %v233, 7
      %236 = vset.pattern.permute.xlu0 %v234
      %237 = vperm.xlu0 %236, %v232
      %v238 = vpop.permute.xlu0 %237
      %v239 = vlaneseq
      %v240 = vshrl.u32 %v239, 7
      %v241 = vadd.s32 %v240, 8
      %242 = vset.pattern.permute.xlu0 %v241
      %243 = vperm.xlu0 %242, %v232
      %v244 = vpop.permute.xlu0 %243
      %v245 = vperm.slane %v121, 1
      %v246 = vlaneseq
      %v247 = vshrl.u32 %v246, 7
      %249 = vset.pattern.permute.xlu0 %v247
      %250 = vperm.xlu0 %249, %v245
      %v251 = vpop.permute.xlu0 %250
      %v252 = vlaneseq
      %v253 = vshrl.u32 %v252, 7
      %v254 = vadd.s32 %v253, 8
      %255 = vset.pattern.permute.xlu0 %v254
      %256 = vperm.xlu0 %255, %v245
      %v257 = vpop.permute.xlu0 %256
      %v258 = vperm.slane %v121, 2
      %v259 = vlaneseq
      %v260 = vshrl.u32 %v259, 7
      %262 = vset.pattern.permute.xlu0 %v260
      %263 = vperm.xlu0 %262, %v258
      %v264 = vpop.permute.xlu0 %263
      %v265 = vlaneseq
      %v266 = vshrl.u32 %v265, 7
      %v267 = vadd.s32 %v266, 8
      %268 = vset.pattern.permute.xlu0 %v267
      %269 = vperm.xlu0 %268, %v258
      %v270 = vpop.permute.xlu0 %269
      %v271 = vperm.slane %v121, 3
      %v272 = vlaneseq
      %v273 = vshrl.u32 %v272, 7
      %275 = vset.pattern.permute.xlu0 %v273
      %276 = vperm.xlu0 %275, %v271
      %v277 = vpop.permute.xlu0 %276
      %v278 = vlaneseq
      %v279 = vshrl.u32 %v278, 7
      %v280 = vadd.s32 %v279, 8
      %281 = vset.pattern.permute.xlu0 %v280
      %282 = vperm.xlu0 %281, %v271
      %v283 = vpop.permute.xlu0 %282
      %v284 = vperm.slane %v121, 4
      %v285 = vlaneseq
      %v286 = vshrl.u32 %v285, 7
      %288 = vset.pattern.permute.xlu0 %v286
      %289 = vperm.xlu0 %288, %v284
      %v290 = vpop.permute.xlu0 %289
      %v291 = vlaneseq
      %v292 = vshrl.u32 %v291, 7
      %v293 = vadd.s32 %v292, 8
      %294 = vset.pattern.permute.xlu0 %v293
      %295 = vperm.xlu0 %294, %v284
      %v296 = vpop.permute.xlu0 %295
      %v297 = vperm.slane %v121, 5
      %v298 = vlaneseq
      %v299 = vshrl.u32 %v298, 7
      %301 = vset.pattern.permute.xlu0 %v299
      %302 = vperm.xlu0 %301, %v297
      %v303 = vpop.permute.xlu0 %302
      %v304 = vlaneseq
      %v305 = vshrl.u32 %v304, 7
      %v306 = vadd.s32 %v305, 8
      %307 = vset.pattern.permute.xlu0 %v306
      %308 = vperm.xlu0 %307, %v297
      %v309 = vpop.permute.xlu0 %308
      %v310 = vperm.slane %v121, 6
      %v311 = vlaneseq
      %v312 = vshrl.u32 %v311, 7
      %314 = vset.pattern.permute.xlu0 %v312
      %315 = vperm.xlu0 %314, %v310
      %v316 = vpop.permute.xlu0 %315
      %v317 = vlaneseq
      %v318 = vshrl.u32 %v317, 7
      %v319 = vadd.s32 %v318, 8
      %320 = vset.pattern.permute.xlu0 %v319
      %321 = vperm.xlu0 %320, %v310
      %v322 = vpop.permute.xlu0 %321
      %v323 = vperm.slane %v121, 7
      %v324 = vlaneseq
      %v325 = vshrl.u32 %v324, 7
      %327 = vset.pattern.permute.xlu0 %v325
      %328 = vperm.xlu0 %327, %v323
      %v329 = vpop.permute.xlu0 %328
      %v330 = vlaneseq
      %v331 = vshrl.u32 %v330, 7
      %v332 = vadd.s32 %v331, 8
      %333 = vset.pattern.permute.xlu0 %v332
      %334 = vperm.xlu0 %333, %v323
      %v335 = vpop.permute.xlu0 %334
      %v336 = vperm.slane %v122, 0
      %v337 = vlaneseq
      %v338 = vshrl.u32 %v337, 7
      %340 = vset.pattern.permute.xlu0 %v338
      %341 = vperm.xlu0 %340, %v336
      %v342 = vpop.permute.xlu0 %341
      %v343 = vlaneseq
      %v344 = vshrl.u32 %v343, 7
      %v345 = vadd.s32 %v344, 8
      %346 = vset.pattern.permute.xlu0 %v345
      %347 = vperm.xlu0 %346, %v336
      %v348 = vpop.permute.xlu0 %347
      %v349 = vperm.slane %v122, 1
      %v350 = vlaneseq
      %v351 = vshrl.u32 %v350, 7
      %353 = vset.pattern.permute.xlu0 %v351
      %354 = vperm.xlu0 %353, %v349
      %v355 = vpop.permute.xlu0 %354
      %v356 = vlaneseq
      %v357 = vshrl.u32 %v356, 7
      %v358 = vadd.s32 %v357, 8
      %359 = vset.pattern.permute.xlu0 %v358
      %360 = vperm.xlu0 %359, %v349
      %v361 = vpop.permute.xlu0 %360
      %v362 = vperm.slane %v122, 2
      %v363 = vlaneseq
      %v364 = vshrl.u32 %v363, 7
      %366 = vset.pattern.permute.xlu0 %v364
      %367 = vperm.xlu0 %366, %v362
      %v368 = vpop.permute.xlu0 %367
      %v369 = vlaneseq
      %v370 = vshrl.u32 %v369, 7
      %v371 = vadd.s32 %v370, 8
      %372 = vset.pattern.permute.xlu0 %v371
      %373 = vperm.xlu0 %372, %v362
      %v374 = vpop.permute.xlu0 %373
      %v375 = vperm.slane %v122, 3
      %v376 = vlaneseq
      %v377 = vshrl.u32 %v376, 7
      %379 = vset.pattern.permute.xlu0 %v377
      %380 = vperm.xlu0 %379, %v375
      %v381 = vpop.permute.xlu0 %380
      %v382 = vlaneseq
      %v383 = vshrl.u32 %v382, 7
      %v384 = vadd.s32 %v383, 8
      %385 = vset.pattern.permute.xlu0 %v384
      %386 = vperm.xlu0 %385, %v375
      %v387 = vpop.permute.xlu0 %386
      %v388 = vperm.slane %v122, 4
      %v389 = vlaneseq
      %v390 = vshrl.u32 %v389, 7
      %392 = vset.pattern.permute.xlu0 %v390
      %393 = vperm.xlu0 %392, %v388
      %v394 = vpop.permute.xlu0 %393
      %v395 = vlaneseq
      %v396 = vshrl.u32 %v395, 7
      %v397 = vadd.s32 %v396, 8
      %398 = vset.pattern.permute.xlu0 %v397
      %399 = vperm.xlu0 %398, %v388
      %v400 = vpop.permute.xlu0 %399
      %v401 = vperm.slane %v122, 5
      %v402 = vlaneseq
      %v403 = vshrl.u32 %v402, 7
      %405 = vset.pattern.permute.xlu0 %v403
      %406 = vperm.xlu0 %405, %v401
      %v407 = vpop.permute.xlu0 %406
      %v408 = vlaneseq
      %v409 = vshrl.u32 %v408, 7
      %v410 = vadd.s32 %v409, 8
      %411 = vset.pattern.permute.xlu0 %v410
      %412 = vperm.xlu0 %411, %v401
      %v413 = vpop.permute.xlu0 %412
      %v414 = vperm.slane %v122, 6
      %v415 = vlaneseq
      %v416 = vshrl.u32 %v415, 7
      %418 = vset.pattern.permute.xlu0 %v416
      %419 = vperm.xlu0 %418, %v414
      %v420 = vpop.permute.xlu0 %419
      %v421 = vlaneseq
      %v422 = vshrl.u32 %v421, 7
      %v423 = vadd.s32 %v422, 8
      %424 = vset.pattern.permute.xlu0 %v423
      %425 = vperm.xlu0 %424, %v414
      %v426 = vpop.permute.xlu0 %425
      %v427 = vperm.slane %v122, 7
      %v428 = vlaneseq
      %v429 = vshrl.u32 %v428, 7
      %431 = vset.pattern.permute.xlu0 %v429
      %432 = vperm.xlu0 %431, %v427
      %v433 = vpop.permute.xlu0 %432
      %v434 = vlaneseq
      %v435 = vshrl.u32 %v434, 7
      %v436 = vadd.s32 %v435, 8
      %437 = vset.pattern.permute.xlu0 %v436
      %438 = vperm.xlu0 %437, %v427
      %v439 = vpop.permute.xlu0 %438
      %v440 = vperm.slane %v123, 0
      %v441 = vlaneseq
      %v442 = vshrl.u32 %v441, 7
      %444 = vset.pattern.permute.xlu0 %v442
      %445 = vperm.xlu0 %444, %v440
      %v446 = vpop.permute.xlu0 %445
      %v447 = vlaneseq
      %v448 = vshrl.u32 %v447, 7
      %v449 = vadd.s32 %v448, 8
      %450 = vset.pattern.permute.xlu0 %v449
      %451 = vperm.xlu0 %450, %v440
      %v452 = vpop.permute.xlu0 %451
      %v453 = vperm.slane %v123, 1
      %v454 = vlaneseq
      %v455 = vshrl.u32 %v454, 7
      %457 = vset.pattern.permute.xlu0 %v455
      %458 = vperm.xlu0 %457, %v453
      %v459 = vpop.permute.xlu0 %458
      %v460 = vlaneseq
      %v461 = vshrl.u32 %v460, 7
      %v462 = vadd.s32 %v461, 8
      %463 = vset.pattern.permute.xlu0 %v462
      %464 = vperm.xlu0 %463, %v453
      %v465 = vpop.permute.xlu0 %464
      %v466 = vperm.slane %v123, 2
      %v467 = vlaneseq
      %v468 = vshrl.u32 %v467, 7
      %470 = vset.pattern.permute.xlu0 %v468
      %471 = vperm.xlu0 %470, %v466
      %v472 = vpop.permute.xlu0 %471
      %v473 = vlaneseq
      %v474 = vshrl.u32 %v473, 7
      %v475 = vadd.s32 %v474, 8
      %476 = vset.pattern.permute.xlu0 %v475
      %477 = vperm.xlu0 %476, %v466
      %v478 = vpop.permute.xlu0 %477
      %v479 = vperm.slane %v123, 3
      %v480 = vlaneseq
      %v481 = vshrl.u32 %v480, 7
      %483 = vset.pattern.permute.xlu0 %v481
      %484 = vperm.xlu0 %483, %v479
      %v485 = vpop.permute.xlu0 %484
      %v486 = vlaneseq
      %v487 = vshrl.u32 %v486, 7
      %v488 = vadd.s32 %v487, 8
      %489 = vset.pattern.permute.xlu0 %v488
      %490 = vperm.xlu0 %489, %v479
      %v491 = vpop.permute.xlu0 %490
      %v492 = vperm.slane %v123, 4
      %v493 = vlaneseq
      %v494 = vshrl.u32 %v493, 7
      %496 = vset.pattern.permute.xlu0 %v494
      %497 = vperm.xlu0 %496, %v492
      %v498 = vpop.permute.xlu0 %497
      %v499 = vlaneseq
      %v500 = vshrl.u32 %v499, 7
      %v501 = vadd.s32 %v500, 8
      %502 = vset.pattern.permute.xlu0 %v501
      %503 = vperm.xlu0 %502, %v492
      %v504 = vpop.permute.xlu0 %503
      %v505 = vperm.slane %v123, 5
      %v506 = vlaneseq
      %v507 = vshrl.u32 %v506, 7
      %509 = vset.pattern.permute.xlu0 %v507
      %510 = vperm.xlu0 %509, %v505
      %v511 = vpop.permute.xlu0 %510
      %v512 = vlaneseq
      %v513 = vshrl.u32 %v512, 7
      %v514 = vadd.s32 %v513, 8
      %515 = vset.pattern.permute.xlu0 %v514
      %516 = vperm.xlu0 %515, %v505
      %v517 = vpop.permute.xlu0 %516
      %v518 = vperm.slane %v123, 6
      %v519 = vlaneseq
      %v520 = vshrl.u32 %v519, 7
      %522 = vset.pattern.permute.xlu0 %v520
      %523 = vperm.xlu0 %522, %v518
      %v524 = vpop.permute.xlu0 %523
      %v525 = vlaneseq
      %v526 = vshrl.u32 %v525, 7
      %v527 = vadd.s32 %v526, 8
      %528 = vset.pattern.permute.xlu0 %v527
      %529 = vperm.xlu0 %528, %v518
      %v530 = vpop.permute.xlu0 %529
      %v531 = vperm.slane %v123, 7
      %v532 = vlaneseq
      %v533 = vshrl.u32 %v532, 7
      %535 = vset.pattern.permute.xlu0 %v533
      %536 = vperm.xlu0 %535, %v531
      %v537 = vpop.permute.xlu0 %536
      %v538 = vlaneseq
      %v539 = vshrl.u32 %v538, 7
      %v540 = vadd.s32 %v539, 8
      %541 = vset.pattern.permute.xlu0 %v540
      %542 = vperm.xlu0 %541, %v531
      %v543 = vpop.permute.xlu0 %542
      %v544 = vperm.slane %v124, 0
      %v545 = vlaneseq
      %v546 = vshrl.u32 %v545, 7
      %548 = vset.pattern.permute.xlu0 %v546
      %549 = vperm.xlu0 %548, %v544
      %v550 = vpop.permute.xlu0 %549
      %v551 = vlaneseq
      %v552 = vshrl.u32 %v551, 7
      %v553 = vadd.s32 %v552, 8
      %554 = vset.pattern.permute.xlu0 %v553
      %555 = vperm.xlu0 %554, %v544
      %v556 = vpop.permute.xlu0 %555
      %v557 = vperm.slane %v124, 1
      %v558 = vlaneseq
      %v559 = vshrl.u32 %v558, 7
      %561 = vset.pattern.permute.xlu0 %v559
      %562 = vperm.xlu0 %561, %v557
      %v563 = vpop.permute.xlu0 %562
      %v564 = vlaneseq
      %v565 = vshrl.u32 %v564, 7
      %v566 = vadd.s32 %v565, 8
      %567 = vset.pattern.permute.xlu0 %v566
      %568 = vperm.xlu0 %567, %v557
      %v569 = vpop.permute.xlu0 %568
      %v570 = vperm.slane %v124, 2
      %v571 = vlaneseq
      %v572 = vshrl.u32 %v571, 7
      %574 = vset.pattern.permute.xlu0 %v572
      %575 = vperm.xlu0 %574, %v570
      %v576 = vpop.permute.xlu0 %575
      %v577 = vlaneseq
      %v578 = vshrl.u32 %v577, 7
      %v579 = vadd.s32 %v578, 8
      %580 = vset.pattern.permute.xlu0 %v579
      %581 = vperm.xlu0 %580, %v570
      %v582 = vpop.permute.xlu0 %581
      %v583 = vperm.slane %v124, 3
      %v584 = vlaneseq
      %v585 = vshrl.u32 %v584, 7
      %587 = vset.pattern.permute.xlu0 %v585
      %588 = vperm.xlu0 %587, %v583
      %v589 = vpop.permute.xlu0 %588
      %v590 = vlaneseq
      %v591 = vshrl.u32 %v590, 7
      %v592 = vadd.s32 %v591, 8
      %593 = vset.pattern.permute.xlu0 %v592
      %594 = vperm.xlu0 %593, %v583
      %v595 = vpop.permute.xlu0 %594
      %v596 = vperm.slane %v124, 4
      %v597 = vlaneseq
      %v598 = vshrl.u32 %v597, 7
      %600 = vset.pattern.permute.xlu0 %v598
      %601 = vperm.xlu0 %600, %v596
      %v602 = vpop.permute.xlu0 %601
      %v603 = vlaneseq
      %v604 = vshrl.u32 %v603, 7
      %v605 = vadd.s32 %v604, 8
      %606 = vset.pattern.permute.xlu0 %v605
      %607 = vperm.xlu0 %606, %v596
      %v608 = vpop.permute.xlu0 %607
      %v609 = vperm.slane %v124, 5
      %v610 = vlaneseq
      %v611 = vshrl.u32 %v610, 7
      %613 = vset.pattern.permute.xlu0 %v611
      %614 = vperm.xlu0 %613, %v609
      %v615 = vpop.permute.xlu0 %614
      %v616 = vlaneseq
      %v617 = vshrl.u32 %v616, 7
      %v618 = vadd.s32 %v617, 8
      %619 = vset.pattern.permute.xlu0 %v618
      %620 = vperm.xlu0 %619, %v609
      %v621 = vpop.permute.xlu0 %620
      %v622 = vperm.slane %v124, 6
      %v623 = vlaneseq
      %v624 = vshrl.u32 %v623, 7
      %626 = vset.pattern.permute.xlu0 %v624
      %627 = vperm.xlu0 %626, %v622
      %v628 = vpop.permute.xlu0 %627
      %v629 = vlaneseq
      %v630 = vshrl.u32 %v629, 7
      %v631 = vadd.s32 %v630, 8
      %632 = vset.pattern.permute.xlu0 %v631
      %633 = vperm.xlu0 %632, %v622
      %v634 = vpop.permute.xlu0 %633
      %v635 = vperm.slane %v124, 7
      %v636 = vlaneseq
      %v637 = vshrl.u32 %v636, 7
      %639 = vset.pattern.permute.xlu0 %v637
      %640 = vperm.xlu0 %639, %v635
      %v641 = vpop.permute.xlu0 %640
      %v642 = vlaneseq
      %v643 = vshrl.u32 %v642, 7
      %v644 = vadd.s32 %v643, 8
      %645 = vset.pattern.permute.xlu0 %v644
      %646 = vperm.xlu0 %645, %v635
      %v647 = vpop.permute.xlu0 %646
      %v648 = vperm.slane %v125, 0
      %v649 = vlaneseq
      %v650 = vshrl.u32 %v649, 7
      %652 = vset.pattern.permute.xlu0 %v650
      %653 = vperm.xlu0 %652, %v648
      %v654 = vpop.permute.xlu0 %653
      %v655 = vlaneseq
      %v656 = vshrl.u32 %v655, 7
      %v657 = vadd.s32 %v656, 8
      %658 = vset.pattern.permute.xlu0 %v657
      %659 = vperm.xlu0 %658, %v648
      %v660 = vpop.permute.xlu0 %659
      %v661 = vperm.slane %v125, 1
      %v662 = vlaneseq
      %v663 = vshrl.u32 %v662, 7
      %665 = vset.pattern.permute.xlu0 %v663
      %666 = vperm.xlu0 %665, %v661
      %v667 = vpop.permute.xlu0 %666
      %v668 = vlaneseq
      %v669 = vshrl.u32 %v668, 7
      %v670 = vadd.s32 %v669, 8
      %671 = vset.pattern.permute.xlu0 %v670
      %672 = vperm.xlu0 %671, %v661
      %v673 = vpop.permute.xlu0 %672
      %v674 = vperm.slane %v125, 2
      %v675 = vlaneseq
      %v676 = vshrl.u32 %v675, 7
      %678 = vset.pattern.permute.xlu0 %v676
      %679 = vperm.xlu0 %678, %v674
      %v680 = vpop.permute.xlu0 %679
      %v681 = vlaneseq
      %v682 = vshrl.u32 %v681, 7
      %v683 = vadd.s32 %v682, 8
      %684 = vset.pattern.permute.xlu0 %v683
      %685 = vperm.xlu0 %684, %v674
      %v686 = vpop.permute.xlu0 %685
      %v687 = vperm.slane %v125, 3
      %v688 = vlaneseq
      %v689 = vshrl.u32 %v688, 7
      %691 = vset.pattern.permute.xlu0 %v689
      %692 = vperm.xlu0 %691, %v687
      %v693 = vpop.permute.xlu0 %692
      %v694 = vlaneseq
      %v695 = vshrl.u32 %v694, 7
      %v696 = vadd.s32 %v695, 8
      %697 = vset.pattern.permute.xlu0 %v696
      %698 = vperm.xlu0 %697, %v687
      %v699 = vpop.permute.xlu0 %698
      %v700 = vperm.slane %v125, 4
      %v701 = vlaneseq
      %v702 = vshrl.u32 %v701, 7
      %704 = vset.pattern.permute.xlu0 %v702
      %705 = vperm.xlu0 %704, %v700
      %v706 = vpop.permute.xlu0 %705
      %v707 = vlaneseq
      %v708 = vshrl.u32 %v707, 7
      %v709 = vadd.s32 %v708, 8
      %710 = vset.pattern.permute.xlu0 %v709
      %711 = vperm.xlu0 %710, %v700
      %v712 = vpop.permute.xlu0 %711
      %v713 = vperm.slane %v125, 5
      %v714 = vlaneseq
      %v715 = vshrl.u32 %v714, 7
      %717 = vset.pattern.permute.xlu0 %v715
      %718 = vperm.xlu0 %717, %v713
      %v719 = vpop.permute.xlu0 %718
      %v720 = vlaneseq
      %v721 = vshrl.u32 %v720, 7
      %v722 = vadd.s32 %v721, 8
      %723 = vset.pattern.permute.xlu0 %v722
      %724 = vperm.xlu0 %723, %v713
      %v725 = vpop.permute.xlu0 %724
      %v726 = vperm.slane %v125, 6
      %v727 = vlaneseq
      %v728 = vshrl.u32 %v727, 7
      %730 = vset.pattern.permute.xlu0 %v728
      %731 = vperm.xlu0 %730, %v726
      %v732 = vpop.permute.xlu0 %731
      %v733 = vlaneseq
      %v734 = vshrl.u32 %v733, 7
      %v735 = vadd.s32 %v734, 8
      %736 = vset.pattern.permute.xlu0 %v735
      %737 = vperm.xlu0 %736, %v726
      %v738 = vpop.permute.xlu0 %737
      %v739 = vperm.slane %v125, 7
      %v740 = vlaneseq
      %v741 = vshrl.u32 %v740, 7
      %743 = vset.pattern.permute.xlu0 %v741
      %744 = vperm.xlu0 %743, %v739
      %v745 = vpop.permute.xlu0 %744
      %v746 = vlaneseq
      %v747 = vshrl.u32 %v746, 7
      %v748 = vadd.s32 %v747, 8
      %749 = vset.pattern.permute.xlu0 %v748
      %750 = vperm.xlu0 %749, %v739
      %v751 = vpop.permute.xlu0 %750
      %v752 = vperm.slane %v126, 0
      %v753 = vlaneseq
      %v754 = vshrl.u32 %v753, 7
      %756 = vset.pattern.permute.xlu0 %v754
      %757 = vperm.xlu0 %756, %v752
      %v758 = vpop.permute.xlu0 %757
      %v759 = vlaneseq
      %v760 = vshrl.u32 %v759, 7
      %v761 = vadd.s32 %v760, 8
      %762 = vset.pattern.permute.xlu0 %v761
      %763 = vperm.xlu0 %762, %v752
      %v764 = vpop.permute.xlu0 %763
      %v765 = vperm.slane %v126, 1
      %v766 = vlaneseq
      %v767 = vshrl.u32 %v766, 7
      %769 = vset.pattern.permute.xlu0 %v767
      %770 = vperm.xlu0 %769, %v765
      %v771 = vpop.permute.xlu0 %770
      %v772 = vlaneseq
      %v773 = vshrl.u32 %v772, 7
      %v774 = vadd.s32 %v773, 8
      %775 = vset.pattern.permute.xlu0 %v774
      %776 = vperm.xlu0 %775, %v765
      %v777 = vpop.permute.xlu0 %776
      %v778 = vperm.slane %v126, 2
      %v779 = vlaneseq
      %v780 = vshrl.u32 %v779, 7
      %782 = vset.pattern.permute.xlu0 %v780
      %783 = vperm.xlu0 %782, %v778
      %v784 = vpop.permute.xlu0 %783
      %v785 = vlaneseq
      %v786 = vshrl.u32 %v785, 7
      %v787 = vadd.s32 %v786, 8
      %788 = vset.pattern.permute.xlu0 %v787
      %789 = vperm.xlu0 %788, %v778
      %v790 = vpop.permute.xlu0 %789
      %v791 = vperm.slane %v126, 3
      %v792 = vlaneseq
      %v793 = vshrl.u32 %v792, 7
      %795 = vset.pattern.permute.xlu0 %v793
      %796 = vperm.xlu0 %795, %v791
      %v797 = vpop.permute.xlu0 %796
      %v798 = vlaneseq
      %v799 = vshrl.u32 %v798, 7
      %v800 = vadd.s32 %v799, 8
      %801 = vset.pattern.permute.xlu0 %v800
      %802 = vperm.xlu0 %801, %v791
      %v803 = vpop.permute.xlu0 %802
      %v804 = vperm.slane %v126, 4
      %v805 = vlaneseq
      %v806 = vshrl.u32 %v805, 7
      %808 = vset.pattern.permute.xlu0 %v806
      %809 = vperm.xlu0 %808, %v804
      %v810 = vpop.permute.xlu0 %809
      %v811 = vlaneseq
      %v812 = vshrl.u32 %v811, 7
      %v813 = vadd.s32 %v812, 8
      %814 = vset.pattern.permute.xlu0 %v813
      %815 = vperm.xlu0 %814, %v804
      %v816 = vpop.permute.xlu0 %815
      %v817 = vperm.slane %v126, 5
      %v818 = vlaneseq
      %v819 = vshrl.u32 %v818, 7
      %821 = vset.pattern.permute.xlu0 %v819
      %822 = vperm.xlu0 %821, %v817
      %v823 = vpop.permute.xlu0 %822
      %v824 = vlaneseq
      %v825 = vshrl.u32 %v824, 7
      %v826 = vadd.s32 %v825, 8
      %827 = vset.pattern.permute.xlu0 %v826
      %828 = vperm.xlu0 %827, %v817
      %v829 = vpop.permute.xlu0 %828
      %v830 = vperm.slane %v126, 6
      %v831 = vlaneseq
      %v832 = vshrl.u32 %v831, 7
      %834 = vset.pattern.permute.xlu0 %v832
      %835 = vperm.xlu0 %834, %v830
      %v836 = vpop.permute.xlu0 %835
      %v837 = vlaneseq
      %v838 = vshrl.u32 %v837, 7
      %v839 = vadd.s32 %v838, 8
      %840 = vset.pattern.permute.xlu0 %v839
      %841 = vperm.xlu0 %840, %v830
      %v842 = vpop.permute.xlu0 %841
      %v843 = vperm.slane %v126, 7
      %v844 = vlaneseq
      %v845 = vshrl.u32 %v844, 7
      %847 = vset.pattern.permute.xlu0 %v845
      %848 = vperm.xlu0 %847, %v843
      %v849 = vpop.permute.xlu0 %848
      %v850 = vlaneseq
      %v851 = vshrl.u32 %v850, 7
      %v852 = vadd.s32 %v851, 8
      %853 = vset.pattern.permute.xlu0 %v852
      %854 = vperm.xlu0 %853, %v843
      %v855 = vpop.permute.xlu0 %854
      %v856 = vperm.slane %v127, 0
      %v857 = vlaneseq
      %v858 = vshrl.u32 %v857, 7
      %860 = vset.pattern.permute.xlu0 %v858
      %861 = vperm.xlu0 %860, %v856
      %v862 = vpop.permute.xlu0 %861
      %v863 = vlaneseq
      %v864 = vshrl.u32 %v863, 7
      %v865 = vadd.s32 %v864, 8
      %866 = vset.pattern.permute.xlu0 %v865
      %867 = vperm.xlu0 %866, %v856
      %v868 = vpop.permute.xlu0 %867
      %v869 = vperm.slane %v127, 1
      %v870 = vlaneseq
      %v871 = vshrl.u32 %v870, 7
      %873 = vset.pattern.permute.xlu0 %v871
      %874 = vperm.xlu0 %873, %v869
      %v875 = vpop.permute.xlu0 %874
      %v876 = vlaneseq
      %v877 = vshrl.u32 %v876, 7
      %v878 = vadd.s32 %v877, 8
      %879 = vset.pattern.permute.xlu0 %v878
      %880 = vperm.xlu0 %879, %v869
      %v881 = vpop.permute.xlu0 %880
      %v882 = vperm.slane %v127, 2
      %v883 = vlaneseq
      %v884 = vshrl.u32 %v883, 7
      %886 = vset.pattern.permute.xlu0 %v884
      %887 = vperm.xlu0 %886, %v882
      %v888 = vpop.permute.xlu0 %887
      %v889 = vlaneseq
      %v890 = vshrl.u32 %v889, 7
      %v891 = vadd.s32 %v890, 8
      %892 = vset.pattern.permute.xlu0 %v891
      %893 = vperm.xlu0 %892, %v882
      %v894 = vpop.permute.xlu0 %893
      %v895 = vperm.slane %v127, 3
      %v896 = vlaneseq
      %v897 = vshrl.u32 %v896, 7
      %899 = vset.pattern.permute.xlu0 %v897
      %900 = vperm.xlu0 %899, %v895
      %v901 = vpop.permute.xlu0 %900
      %v902 = vlaneseq
      %v903 = vshrl.u32 %v902, 7
      %v904 = vadd.s32 %v903, 8
      %905 = vset.pattern.permute.xlu0 %v904
      %906 = vperm.xlu0 %905, %v895
      %v907 = vpop.permute.xlu0 %906
      %v908 = vperm.slane %v127, 4
      %v909 = vlaneseq
      %v910 = vshrl.u32 %v909, 7
      %912 = vset.pattern.permute.xlu0 %v910
      %913 = vperm.xlu0 %912, %v908
      %v914 = vpop.permute.xlu0 %913
      %v915 = vlaneseq
      %v916 = vshrl.u32 %v915, 7
      %v917 = vadd.s32 %v916, 8
      %918 = vset.pattern.permute.xlu0 %v917
      %919 = vperm.xlu0 %918, %v908
      %v920 = vpop.permute.xlu0 %919
      %v921 = vperm.slane %v127, 5
      %v922 = vlaneseq
      %v923 = vshrl.u32 %v922, 7
      %925 = vset.pattern.permute.xlu0 %v923
      %926 = vperm.xlu0 %925, %v921
      %v927 = vpop.permute.xlu0 %926
      %v928 = vlaneseq
      %v929 = vshrl.u32 %v928, 7
      %v930 = vadd.s32 %v929, 8
      %931 = vset.pattern.permute.xlu0 %v930
      %932 = vperm.xlu0 %931, %v921
      %v933 = vpop.permute.xlu0 %932
      %v934 = vperm.slane %v127, 6
      %v935 = vlaneseq
      %v936 = vshrl.u32 %v935, 7
      %938 = vset.pattern.permute.xlu0 %v936
      %939 = vperm.xlu0 %938, %v934
      %v940 = vpop.permute.xlu0 %939
      %v941 = vlaneseq
      %v942 = vshrl.u32 %v941, 7
      %v943 = vadd.s32 %v942, 8
      %944 = vset.pattern.permute.xlu0 %v943
      %945 = vperm.xlu0 %944, %v934
      %v946 = vpop.permute.xlu0 %945
      %v947 = vperm.slane %v127, 7
      %v948 = vlaneseq
      %v949 = vshrl.u32 %v948, 7
      %951 = vset.pattern.permute.xlu0 %v949
      %952 = vperm.xlu0 %951, %v947
      %v953 = vpop.permute.xlu0 %952
      %v954 = vlaneseq
      %v955 = vshrl.u32 %v954, 7
      %v956 = vadd.s32 %v955, 8
      %957 = vset.pattern.permute.xlu0 %v956
      %958 = vperm.xlu0 %957, %v947
      %v959 = vpop.permute.xlu0 %958
      %v960 = vrot.slane %v160, 4
      %vm961 = vcmask 1047556
      %v962 = vsel %vm961, %v960, %v134
      %v963 = vrot.slane %v134, 4
      %v964 = vsel %vm961, %v160, %v963
      %v966 = vunpack.c.l.s4 1983009808
      %v967 = vunpack.c.0.s8 %v966
      %v968 = vperm.slane %v962, %v967
      %v970 = vunpack.c.l.s4 1983009808
      %v971 = vunpack.c.0.s8 %v970
      %v972 = vperm.slane %v964, %v971
      %v973 = vrot.slane %v173, 4
      %v974 = vsel %vm961, %v973, %v147
      %v975 = vrot.slane %v147, 4
      %v976 = vsel %vm961, %v173, %v975
      %v978 = vunpack.c.l.s4 1983009808
      %v979 = vunpack.c.0.s8 %v978
      %v980 = vperm.slane %v974, %v979
      %v982 = vunpack.c.l.s4 1983009808
      %v983 = vunpack.c.0.s8 %v982
      %v984 = vperm.slane %v976, %v983
      %v985 = vrot.slane %v212, 4
      %v986 = vsel %vm961, %v985, %v186
      %v987 = vrot.slane %v186, 4
      %v988 = vsel %vm961, %v212, %v987
      %v990 = vunpack.c.l.s4 1983009808
      %v991 = vunpack.c.0.s8 %v990
      %v992 = vperm.slane %v986, %v991
      %v994 = vunpack.c.l.s4 1983009808
      %v995 = vunpack.c.0.s8 %v994
      %v996 = vperm.slane %v988, %v995
      %v997 = vrot.slane %v225, 4
      %v998 = vsel %vm961, %v997, %v199
      %v999 = vrot.slane %v199, 4
      %v1000 = vsel %vm961, %v225, %v999
      %v1002 = vunpack.c.l.s4 1983009808
      %v1003 = vunpack.c.0.s8 %v1002
      %v1004 = vperm.slane %v998, %v1003
      %v1006 = vunpack.c.l.s4 1983009808
      %v1007 = vunpack.c.0.s8 %v1006
      %v1008 = vperm.slane %v1000, %v1007
      %v1009 = vrot.slane %v980, 4
      %v1010 = vsel %vm961, %v1009, %v968
      %v1011 = vrot.slane %v968, 4
      %v1012 = vsel %vm961, %v980, %v1011
      %v1014 = vunpack.c.l.s4 1934713408
      %v1015 = vunpack.c.0.s8 %v1014
      %v1016 = vperm.slane %v1010, %v1015
      %v1018 = vunpack.c.l.s4 1934713408
      %v1019 = vunpack.c.0.s8 %v1018
      %v1020 = vperm.slane %v1012, %v1019
      %v1021 = vrot.slane %v984, 4
      %v1022 = vsel %vm961, %v1021, %v972
      %v1023 = vrot.slane %v972, 4
      %v1024 = vsel %vm961, %v984, %v1023
      %v1026 = vunpack.c.l.s4 1934713408
      %v1027 = vunpack.c.0.s8 %v1026
      %v1028 = vperm.slane %v1022, %v1027
      %v1030 = vunpack.c.l.s4 1934713408
      %v1031 = vunpack.c.0.s8 %v1030
      %v1032 = vperm.slane %v1024, %v1031
      %v1033 = vrot.slane %v1004, 4
      %v1034 = vsel %vm961, %v1033, %v992
      %v1035 = vrot.slane %v992, 4
      %v1036 = vsel %vm961, %v1004, %v1035
      %v1038 = vunpack.c.l.s4 1934713408
      %v1039 = vunpack.c.0.s8 %v1038
      %v1040 = vperm.slane %v1034, %v1039
      %v1042 = vunpack.c.l.s4 1934713408
      %v1043 = vunpack.c.0.s8 %v1042
      %v1044 = vperm.slane %v1036, %v1043
      %v1045 = vrot.slane %v1008, 4
      %v1046 = vsel %vm961, %v1045, %v996
      %v1047 = vrot.slane %v996, 4
      %v1048 = vsel %vm961, %v1008, %v1047
      %v1050 = vunpack.c.l.s4 1934713408
      %v1051 = vunpack.c.0.s8 %v1050
      %v1052 = vperm.slane %v1046, %v1051
      %v1054 = vunpack.c.l.s4 1934713408
      %v1055 = vunpack.c.0.s8 %v1054
      %v1056 = vperm.slane %v1048, %v1055
      %v1057 = vrot.slane %v1040, 4
      %v1058 = vsel %vm961, %v1057, %v1016
      %v1059 = vrot.slane %v1016, 4
      %v1060 = vsel %vm961, %v1040, %v1059
      %v1061 = vrot.slane %v1044, 4
      %v1062 = vsel %vm961, %v1061, %v1020
      %v1063 = vrot.slane %v1020, 4
      %v1064 = vsel %vm961, %v1044, %v1063
      %v1065 = vrot.slane %v1052, 4
      %v1066 = vsel %vm961, %v1065, %v1028
      %v1067 = vrot.slane %v1028, 4
      %v1068 = vsel %vm961, %v1052, %v1067
      %v1069 = vrot.slane %v1056, 4
      %v1070 = vsel %vm961, %v1069, %v1032
      %v1071 = vrot.slane %v1032, 4
      %v1072 = vsel %vm961, %v1056, %v1071
      %v1073 = vrot.slane %v264, 4
      %v1074 = vsel %vm961, %v1073, %v238
      %v1075 = vrot.slane %v238, 4
      %v1076 = vsel %vm961, %v264, %v1075
      %v1078 = vunpack.c.l.s4 1983009808
      %v1079 = vunpack.c.0.s8 %v1078
      %v1080 = vperm.slane %v1074, %v1079
      %v1082 = vunpack.c.l.s4 1983009808
      %v1083 = vunpack.c.0.s8 %v1082
      %v1084 = vperm.slane %v1076, %v1083
      %v1085 = vrot.slane %v277, 4
      %v1086 = vsel %vm961, %v1085, %v251
      %v1087 = vrot.slane %v251, 4
      %v1088 = vsel %vm961, %v277, %v1087
      %v1090 = vunpack.c.l.s4 1983009808
      %v1091 = vunpack.c.0.s8 %v1090
      %v1092 = vperm.slane %v1086, %v1091
      %v1094 = vunpack.c.l.s4 1983009808
      %v1095 = vunpack.c.0.s8 %v1094
      %v1096 = vperm.slane %v1088, %v1095
      %v1097 = vrot.slane %v316, 4
      %v1098 = vsel %vm961, %v1097, %v290
      %v1099 = vrot.slane %v290, 4
      %v1100 = vsel %vm961, %v316, %v1099
      %v1102 = vunpack.c.l.s4 1983009808
      %v1103 = vunpack.c.0.s8 %v1102
      %v1104 = vperm.slane %v1098, %v1103
      %v1106 = vunpack.c.l.s4 1983009808
      %v1107 = vunpack.c.0.s8 %v1106
      %v1108 = vperm.slane %v1100, %v1107
      %v1109 = vrot.slane %v329, 4
      %v1110 = vsel %vm961, %v1109, %v303
      %v1111 = vrot.slane %v303, 4
      %v1112 = vsel %vm961, %v329, %v1111
      %v1114 = vunpack.c.l.s4 1983009808
      %v1115 = vunpack.c.0.s8 %v1114
      %v1116 = vperm.slane %v1110, %v1115
      %v1118 = vunpack.c.l.s4 1983009808
      %v1119 = vunpack.c.0.s8 %v1118
      %v1120 = vperm.slane %v1112, %v1119
      %v1121 = vrot.slane %v1092, 4
      %v1122 = vsel %vm961, %v1121, %v1080
      %v1123 = vrot.slane %v1080, 4
      %v1124 = vsel %vm961, %v1092, %v1123
      %v1126 = vunpack.c.l.s4 1934713408
      %v1127 = vunpack.c.0.s8 %v1126
      %v1128 = vperm.slane %v1122, %v1127
      %v1130 = vunpack.c.l.s4 1934713408
      %v1131 = vunpack.c.0.s8 %v1130
      %v1132 = vperm.slane %v1124, %v1131
      %v1133 = vrot.slane %v1096, 4
      %v1134 = vsel %vm961, %v1133, %v1084
      %v1135 = vrot.slane %v1084, 4
      %v1136 = vsel %vm961, %v1096, %v1135
      %v1138 = vunpack.c.l.s4 1934713408
      %v1139 = vunpack.c.0.s8 %v1138
      %v1140 = vperm.slane %v1134, %v1139
      %v1142 = vunpack.c.l.s4 1934713408
      %v1143 = vunpack.c.0.s8 %v1142
      %v1144 = vperm.slane %v1136, %v1143
      %v1145 = vrot.slane %v1116, 4
      %v1146 = vsel %vm961, %v1145, %v1104
      %v1147 = vrot.slane %v1104, 4
      %v1148 = vsel %vm961, %v1116, %v1147
      %v1150 = vunpack.c.l.s4 1934713408
      %v1151 = vunpack.c.0.s8 %v1150
      %v1152 = vperm.slane %v1146, %v1151
      %v1154 = vunpack.c.l.s4 1934713408
      %v1155 = vunpack.c.0.s8 %v1154
      %v1156 = vperm.slane %v1148, %v1155
      %v1157 = vrot.slane %v1120, 4
      %v1158 = vsel %vm961, %v1157, %v1108
      %v1159 = vrot.slane %v1108, 4
      %v1160 = vsel %vm961, %v1120, %v1159
      %v1162 = vunpack.c.l.s4 1934713408
      %v1163 = vunpack.c.0.s8 %v1162
      %v1164 = vperm.slane %v1158, %v1163
      %v1166 = vunpack.c.l.s4 1934713408
      %v1167 = vunpack.c.0.s8 %v1166
      %v1168 = vperm.slane %v1160, %v1167
      %v1169 = vrot.slane %v1152, 4
      %v1170 = vsel %vm961, %v1169, %v1128
      %v1171 = vrot.slane %v1128, 4
      %v1172 = vsel %vm961, %v1152, %v1171
      %v1173 = vrot.slane %v1156, 4
      %v1174 = vsel %vm961, %v1173, %v1132
      %v1175 = vrot.slane %v1132, 4
      %v1176 = vsel %vm961, %v1156, %v1175
      %v1177 = vrot.slane %v1164, 4
      %v1178 = vsel %vm961, %v1177, %v1140
      %v1179 = vrot.slane %v1140, 4
      %v1180 = vsel %vm961, %v1164, %v1179
      %v1181 = vrot.slane %v1168, 4
      %v1182 = vsel %vm961, %v1181, %v1144
      %v1183 = vrot.slane %v1144, 4
      %v1184 = vsel %vm961, %v1168, %v1183
      %v1185 = vrot.slane %v368, 4
      %v1186 = vsel %vm961, %v1185, %v342
      %v1187 = vrot.slane %v342, 4
      %v1188 = vsel %vm961, %v368, %v1187
      %v1190 = vunpack.c.l.s4 1983009808
      %v1191 = vunpack.c.0.s8 %v1190
      %v1192 = vperm.slane %v1186, %v1191
      %v1194 = vunpack.c.l.s4 1983009808
      %v1195 = vunpack.c.0.s8 %v1194
      %v1196 = vperm.slane %v1188, %v1195
      %v1197 = vrot.slane %v381, 4
      %v1198 = vsel %vm961, %v1197, %v355
      %v1199 = vrot.slane %v355, 4
      %v1200 = vsel %vm961, %v381, %v1199
      %v1202 = vunpack.c.l.s4 1983009808
      %v1203 = vunpack.c.0.s8 %v1202
      %v1204 = vperm.slane %v1198, %v1203
      %v1206 = vunpack.c.l.s4 1983009808
      %v1207 = vunpack.c.0.s8 %v1206
      %v1208 = vperm.slane %v1200, %v1207
      %v1209 = vrot.slane %v420, 4
      %v1210 = vsel %vm961, %v1209, %v394
      %v1211 = vrot.slane %v394, 4
      %v1212 = vsel %vm961, %v420, %v1211
      %v1214 = vunpack.c.l.s4 1983009808
      %v1215 = vunpack.c.0.s8 %v1214
      %v1216 = vperm.slane %v1210, %v1215
      %v1218 = vunpack.c.l.s4 1983009808
      %v1219 = vunpack.c.0.s8 %v1218
      %v1220 = vperm.slane %v1212, %v1219
      %v1221 = vrot.slane %v433, 4
      %v1222 = vsel %vm961, %v1221, %v407
      %v1223 = vrot.slane %v407, 4
      %v1224 = vsel %vm961, %v433, %v1223
      %v1226 = vunpack.c.l.s4 1983009808
      %v1227 = vunpack.c.0.s8 %v1226
      %v1228 = vperm.slane %v1222, %v1227
      %v1230 = vunpack.c.l.s4 1983009808
      %v1231 = vunpack.c.0.s8 %v1230
      %v1232 = vperm.slane %v1224, %v1231
      %v1233 = vrot.slane %v1204, 4
      %v1234 = vsel %vm961, %v1233, %v1192
      %v1235 = vrot.slane %v1192, 4
      %v1236 = vsel %vm961, %v1204, %v1235
      %v1238 = vunpack.c.l.s4 1934713408
      %v1239 = vunpack.c.0.s8 %v1238
      %v1240 = vperm.slane %v1234, %v1239
      %v1242 = vunpack.c.l.s4 1934713408
      %v1243 = vunpack.c.0.s8 %v1242
      %v1244 = vperm.slane %v1236, %v1243
      %v1245 = vrot.slane %v1208, 4
      %v1246 = vsel %vm961, %v1245, %v1196
      %v1247 = vrot.slane %v1196, 4
      %v1248 = vsel %vm961, %v1208, %v1247
      %v1250 = vunpack.c.l.s4 1934713408
      %v1251 = vunpack.c.0.s8 %v1250
      %v1252 = vperm.slane %v1246, %v1251
      %v1254 = vunpack.c.l.s4 1934713408
      %v1255 = vunpack.c.0.s8 %v1254
      %v1256 = vperm.slane %v1248, %v1255
      %v1257 = vrot.slane %v1228, 4
      %v1258 = vsel %vm961, %v1257, %v1216
      %v1259 = vrot.slane %v1216, 4
      %v1260 = vsel %vm961, %v1228, %v1259
      %v1262 = vunpack.c.l.s4 1934713408
      %v1263 = vunpack.c.0.s8 %v1262
      %v1264 = vperm.slane %v1258, %v1263
      %v1266 = vunpack.c.l.s4 1934713408
      %v1267 = vunpack.c.0.s8 %v1266
      %v1268 = vperm.slane %v1260, %v1267
      %v1269 = vrot.slane %v1232, 4
      %v1270 = vsel %vm961, %v1269, %v1220
      %v1271 = vrot.slane %v1220, 4
      %v1272 = vsel %vm961, %v1232, %v1271
      %v1274 = vunpack.c.l.s4 1934713408
      %v1275 = vunpack.c.0.s8 %v1274
      %v1276 = vperm.slane %v1270, %v1275
      %v1278 = vunpack.c.l.s4 1934713408
      %v1279 = vunpack.c.0.s8 %v1278
      %v1280 = vperm.slane %v1272, %v1279
      %v1281 = vrot.slane %v1264, 4
      %v1282 = vsel %vm961, %v1281, %v1240
      %v1283 = vrot.slane %v1240, 4
      %v1284 = vsel %vm961, %v1264, %v1283
      %v1285 = vrot.slane %v1268, 4
      %v1286 = vsel %vm961, %v1285, %v1244
      %v1287 = vrot.slane %v1244, 4
      %v1288 = vsel %vm961, %v1268, %v1287
      %v1289 = vrot.slane %v1276, 4
      %v1290 = vsel %vm961, %v1289, %v1252
      %v1291 = vrot.slane %v1252, 4
      %v1292 = vsel %vm961, %v1276, %v1291
      %v1293 = vrot.slane %v1280, 4
      %v1294 = vsel %vm961, %v1293, %v1256
      %v1295 = vrot.slane %v1256, 4
      %v1296 = vsel %vm961, %v1280, %v1295
      %v1297 = vrot.slane %v472, 4
      %v1298 = vsel %vm961, %v1297, %v446
      %v1299 = vrot.slane %v446, 4
      %v1300 = vsel %vm961, %v472, %v1299
      %v1302 = vunpack.c.l.s4 1983009808
      %v1303 = vunpack.c.0.s8 %v1302
      %v1304 = vperm.slane %v1298, %v1303
      %v1306 = vunpack.c.l.s4 1983009808
      %v1307 = vunpack.c.0.s8 %v1306
      %v1308 = vperm.slane %v1300, %v1307
      %v1309 = vrot.slane %v485, 4
      %v1310 = vsel %vm961, %v1309, %v459
      %v1311 = vrot.slane %v459, 4
      %v1312 = vsel %vm961, %v485, %v1311
      %v1314 = vunpack.c.l.s4 1983009808
      %v1315 = vunpack.c.0.s8 %v1314
      %v1316 = vperm.slane %v1310, %v1315
      %v1318 = vunpack.c.l.s4 1983009808
      %v1319 = vunpack.c.0.s8 %v1318
      %v1320 = vperm.slane %v1312, %v1319
      %v1321 = vrot.slane %v524, 4
      %v1322 = vsel %vm961, %v1321, %v498
      %v1323 = vrot.slane %v498, 4
      %v1324 = vsel %vm961, %v524, %v1323
      %v1326 = vunpack.c.l.s4 1983009808
      %v1327 = vunpack.c.0.s8 %v1326
      %v1328 = vperm.slane %v1322, %v1327
      %v1330 = vunpack.c.l.s4 1983009808
      %v1331 = vunpack.c.0.s8 %v1330
      %v1332 = vperm.slane %v1324, %v1331
      %v1333 = vrot.slane %v537, 4
      %v1334 = vsel %vm961, %v1333, %v511
      %v1335 = vrot.slane %v511, 4
      %v1336 = vsel %vm961, %v537, %v1335
      %v1338 = vunpack.c.l.s4 1983009808
      %v1339 = vunpack.c.0.s8 %v1338
      %v1340 = vperm.slane %v1334, %v1339
      %v1342 = vunpack.c.l.s4 1983009808
      %v1343 = vunpack.c.0.s8 %v1342
      %v1344 = vperm.slane %v1336, %v1343
      %v1345 = vrot.slane %v1316, 4
      %v1346 = vsel %vm961, %v1345, %v1304
      %v1347 = vrot.slane %v1304, 4
      %v1348 = vsel %vm961, %v1316, %v1347
      %v1350 = vunpack.c.l.s4 1934713408
      %v1351 = vunpack.c.0.s8 %v1350
      %v1352 = vperm.slane %v1346, %v1351
      %v1354 = vunpack.c.l.s4 1934713408
      %v1355 = vunpack.c.0.s8 %v1354
      %v1356 = vperm.slane %v1348, %v1355
      %v1357 = vrot.slane %v1320, 4
      %v1358 = vsel %vm961, %v1357, %v1308
      %v1359 = vrot.slane %v1308, 4
      %v1360 = vsel %vm961, %v1320, %v1359
      %v1362 = vunpack.c.l.s4 1934713408
      %v1363 = vunpack.c.0.s8 %v1362
      %v1364 = vperm.slane %v1358, %v1363
      %v1366 = vunpack.c.l.s4 1934713408
      %v1367 = vunpack.c.0.s8 %v1366
      %v1368 = vperm.slane %v1360, %v1367
      %v1369 = vrot.slane %v1340, 4
      %v1370 = vsel %vm961, %v1369, %v1328
      %v1371 = vrot.slane %v1328, 4
      %v1372 = vsel %vm961, %v1340, %v1371
      %v1374 = vunpack.c.l.s4 1934713408
      %v1375 = vunpack.c.0.s8 %v1374
      %v1376 = vperm.slane %v1370, %v1375
      %v1378 = vunpack.c.l.s4 1934713408
      %v1379 = vunpack.c.0.s8 %v1378
      %v1380 = vperm.slane %v1372, %v1379
      %v1381 = vrot.slane %v1344, 4
      %v1382 = vsel %vm961, %v1381, %v1332
      %v1383 = vrot.slane %v1332, 4
      %v1384 = vsel %vm961, %v1344, %v1383
      %v1386 = vunpack.c.l.s4 1934713408
      %v1387 = vunpack.c.0.s8 %v1386
      %v1388 = vperm.slane %v1382, %v1387
      %v1390 = vunpack.c.l.s4 1934713408
      %v1391 = vunpack.c.0.s8 %v1390
      %v1392 = vperm.slane %v1384, %v1391
      %v1393 = vrot.slane %v1376, 4
      %v1394 = vsel %vm961, %v1393, %v1352
      %v1395 = vrot.slane %v1352, 4
      %v1396 = vsel %vm961, %v1376, %v1395
      %v1397 = vrot.slane %v1380, 4
      %v1398 = vsel %vm961, %v1397, %v1356
      %v1399 = vrot.slane %v1356, 4
      %v1400 = vsel %vm961, %v1380, %v1399
      %v1401 = vrot.slane %v1388, 4
      %v1402 = vsel %vm961, %v1401, %v1364
      %v1403 = vrot.slane %v1364, 4
      %v1404 = vsel %vm961, %v1388, %v1403
      %v1405 = vrot.slane %v1392, 4
      %v1406 = vsel %vm961, %v1405, %v1368
      %v1407 = vrot.slane %v1368, 4
      %v1408 = vsel %vm961, %v1392, %v1407
      %v1409 = vrot.slane %v576, 4
      %v1410 = vsel %vm961, %v1409, %v550
      %v1411 = vrot.slane %v550, 4
      %v1412 = vsel %vm961, %v576, %v1411
      %v1414 = vunpack.c.l.s4 1983009808
      %v1415 = vunpack.c.0.s8 %v1414
      %v1416 = vperm.slane %v1410, %v1415
      %v1418 = vunpack.c.l.s4 1983009808
      %v1419 = vunpack.c.0.s8 %v1418
      %v1420 = vperm.slane %v1412, %v1419
      %v1421 = vrot.slane %v589, 4
      %v1422 = vsel %vm961, %v1421, %v563
      %v1423 = vrot.slane %v563, 4
      %v1424 = vsel %vm961, %v589, %v1423
      %v1426 = vunpack.c.l.s4 1983009808
      %v1427 = vunpack.c.0.s8 %v1426
      %v1428 = vperm.slane %v1422, %v1427
      %v1430 = vunpack.c.l.s4 1983009808
      %v1431 = vunpack.c.0.s8 %v1430
      %v1432 = vperm.slane %v1424, %v1431
      %v1433 = vrot.slane %v628, 4
      %v1434 = vsel %vm961, %v1433, %v602
      %v1435 = vrot.slane %v602, 4
      %v1436 = vsel %vm961, %v628, %v1435
      %v1438 = vunpack.c.l.s4 1983009808
      %v1439 = vunpack.c.0.s8 %v1438
      %v1440 = vperm.slane %v1434, %v1439
      %v1442 = vunpack.c.l.s4 1983009808
      %v1443 = vunpack.c.0.s8 %v1442
      %v1444 = vperm.slane %v1436, %v1443
      %v1445 = vrot.slane %v641, 4
      %v1446 = vsel %vm961, %v1445, %v615
      %v1447 = vrot.slane %v615, 4
      %v1448 = vsel %vm961, %v641, %v1447
      %v1450 = vunpack.c.l.s4 1983009808
      %v1451 = vunpack.c.0.s8 %v1450
      %v1452 = vperm.slane %v1446, %v1451
      %v1454 = vunpack.c.l.s4 1983009808
      %v1455 = vunpack.c.0.s8 %v1454
      %v1456 = vperm.slane %v1448, %v1455
      %v1457 = vrot.slane %v1428, 4
      %v1458 = vsel %vm961, %v1457, %v1416
      %v1459 = vrot.slane %v1416, 4
      %v1460 = vsel %vm961, %v1428, %v1459
      %v1462 = vunpack.c.l.s4 1934713408
      %v1463 = vunpack.c.0.s8 %v1462
      %v1464 = vperm.slane %v1458, %v1463
      %v1466 = vunpack.c.l.s4 1934713408
      %v1467 = vunpack.c.0.s8 %v1466
      %v1468 = vperm.slane %v1460, %v1467
      %v1469 = vrot.slane %v1432, 4
      %v1470 = vsel %vm961, %v1469, %v1420
      %v1471 = vrot.slane %v1420, 4
      %v1472 = vsel %vm961, %v1432, %v1471
      %v1474 = vunpack.c.l.s4 1934713408
      %v1475 = vunpack.c.0.s8 %v1474
      %v1476 = vperm.slane %v1470, %v1475
      %v1478 = vunpack.c.l.s4 1934713408
      %v1479 = vunpack.c.0.s8 %v1478
      %v1480 = vperm.slane %v1472, %v1479
      %v1481 = vrot.slane %v1452, 4
      %v1482 = vsel %vm961, %v1481, %v1440
      %v1483 = vrot.slane %v1440, 4
      %v1484 = vsel %vm961, %v1452, %v1483
      %v1486 = vunpack.c.l.s4 1934713408
      %v1487 = vunpack.c.0.s8 %v1486
      %v1488 = vperm.slane %v1482, %v1487
      %v1490 = vunpack.c.l.s4 1934713408
      %v1491 = vunpack.c.0.s8 %v1490
      %v1492 = vperm.slane %v1484, %v1491
      %v1493 = vrot.slane %v1456, 4
      %v1494 = vsel %vm961, %v1493, %v1444
      %v1495 = vrot.slane %v1444, 4
      %v1496 = vsel %vm961, %v1456, %v1495
      %v1498 = vunpack.c.l.s4 1934713408
      %v1499 = vunpack.c.0.s8 %v1498
      %v1500 = vperm.slane %v1494, %v1499
      %v1502 = vunpack.c.l.s4 1934713408
      %v1503 = vunpack.c.0.s8 %v1502
      %v1504 = vperm.slane %v1496, %v1503
      %v1505 = vrot.slane %v1488, 4
      %v1506 = vsel %vm961, %v1505, %v1464
      %v1507 = vrot.slane %v1464, 4
      %v1508 = vsel %vm961, %v1488, %v1507
      %v1509 = vrot.slane %v1492, 4
      %v1510 = vsel %vm961, %v1509, %v1468
      %v1511 = vrot.slane %v1468, 4
      %v1512 = vsel %vm961, %v1492, %v1511
      %v1513 = vrot.slane %v1500, 4
      %v1514 = vsel %vm961, %v1513, %v1476
      %v1515 = vrot.slane %v1476, 4
      %v1516 = vsel %vm961, %v1500, %v1515
      %v1517 = vrot.slane %v1504, 4
      %v1518 = vsel %vm961, %v1517, %v1480
      %v1519 = vrot.slane %v1480, 4
      %v1520 = vsel %vm961, %v1504, %v1519
      %v1521 = vrot.slane %v680, 4
      %v1522 = vsel %vm961, %v1521, %v654
      %v1523 = vrot.slane %v654, 4
      %v1524 = vsel %vm961, %v680, %v1523
      %v1526 = vunpack.c.l.s4 1983009808
      %v1527 = vunpack.c.0.s8 %v1526
      %v1528 = vperm.slane %v1522, %v1527
      %v1530 = vunpack.c.l.s4 1983009808
      %v1531 = vunpack.c.0.s8 %v1530
      %v1532 = vperm.slane %v1524, %v1531
      %v1533 = vrot.slane %v693, 4
      %v1534 = vsel %vm961, %v1533, %v667
      %v1535 = vrot.slane %v667, 4
      %v1536 = vsel %vm961, %v693, %v1535
      %v1538 = vunpack.c.l.s4 1983009808
      %v1539 = vunpack.c.0.s8 %v1538
      %v1540 = vperm.slane %v1534, %v1539
      %v1542 = vunpack.c.l.s4 1983009808
      %v1543 = vunpack.c.0.s8 %v1542
      %v1544 = vperm.slane %v1536, %v1543
      %v1545 = vrot.slane %v732, 4
      %v1546 = vsel %vm961, %v1545, %v706
      %v1547 = vrot.slane %v706, 4
      %v1548 = vsel %vm961, %v732, %v1547
      %v1550 = vunpack.c.l.s4 1983009808
      %v1551 = vunpack.c.0.s8 %v1550
      %v1552 = vperm.slane %v1546, %v1551
      %v1554 = vunpack.c.l.s4 1983009808
      %v1555 = vunpack.c.0.s8 %v1554
      %v1556 = vperm.slane %v1548, %v1555
      %v1557 = vrot.slane %v745, 4
      %v1558 = vsel %vm961, %v1557, %v719
      %v1559 = vrot.slane %v719, 4
      %v1560 = vsel %vm961, %v745, %v1559
      %v1562 = vunpack.c.l.s4 1983009808
      %v1563 = vunpack.c.0.s8 %v1562
      %v1564 = vperm.slane %v1558, %v1563
      %v1566 = vunpack.c.l.s4 1983009808
      %v1567 = vunpack.c.0.s8 %v1566
      %v1568 = vperm.slane %v1560, %v1567
      %v1569 = vrot.slane %v1540, 4
      %v1570 = vsel %vm961, %v1569, %v1528
      %v1571 = vrot.slane %v1528, 4
      %v1572 = vsel %vm961, %v1540, %v1571
      %v1574 = vunpack.c.l.s4 1934713408
      %v1575 = vunpack.c.0.s8 %v1574
      %v1576 = vperm.slane %v1570, %v1575
      %v1578 = vunpack.c.l.s4 1934713408
      %v1579 = vunpack.c.0.s8 %v1578
      %v1580 = vperm.slane %v1572, %v1579
      %v1581 = vrot.slane %v1544, 4
      %v1582 = vsel %vm961, %v1581, %v1532
      %v1583 = vrot.slane %v1532, 4
      %v1584 = vsel %vm961, %v1544, %v1583
      %v1586 = vunpack.c.l.s4 1934713408
      %v1587 = vunpack.c.0.s8 %v1586
      %v1588 = vperm.slane %v1582, %v1587
      %v1590 = vunpack.c.l.s4 1934713408
      %v1591 = vunpack.c.0.s8 %v1590
      %v1592 = vperm.slane %v1584, %v1591
      %v1593 = vrot.slane %v1564, 4
      %v1594 = vsel %vm961, %v1593, %v1552
      %v1595 = vrot.slane %v1552, 4
      %v1596 = vsel %vm961, %v1564, %v1595
      %v1598 = vunpack.c.l.s4 1934713408
      %v1599 = vunpack.c.0.s8 %v1598
      %v1600 = vperm.slane %v1594, %v1599
      %v1602 = vunpack.c.l.s4 1934713408
      %v1603 = vunpack.c.0.s8 %v1602
      %v1604 = vperm.slane %v1596, %v1603
      %v1605 = vrot.slane %v1568, 4
      %v1606 = vsel %vm961, %v1605, %v1556
      %v1607 = vrot.slane %v1556, 4
      %v1608 = vsel %vm961, %v1568, %v1607
      %v1610 = vunpack.c.l.s4 1934713408
      %v1611 = vunpack.c.0.s8 %v1610
      %v1612 = vperm.slane %v1606, %v1611
      %v1614 = vunpack.c.l.s4 1934713408
      %v1615 = vunpack.c.0.s8 %v1614
      %v1616 = vperm.slane %v1608, %v1615
      %v1617 = vrot.slane %v1600, 4
      %v1618 = vsel %vm961, %v1617, %v1576
      %v1619 = vrot.slane %v1576, 4
      %v1620 = vsel %vm961, %v1600, %v1619
      %v1621 = vrot.slane %v1604, 4
      %v1622 = vsel %vm961, %v1621, %v1580
      %v1623 = vrot.slane %v1580, 4
      %v1624 = vsel %vm961, %v1604, %v1623
      %v1625 = vrot.slane %v1612, 4
      %v1626 = vsel %vm961, %v1625, %v1588
      %v1627 = vrot.slane %v1588, 4
      %v1628 = vsel %vm961, %v1612, %v1627
      %v1629 = vrot.slane %v1616, 4
      %v1630 = vsel %vm961, %v1629, %v1592
      %v1631 = vrot.slane %v1592, 4
      %v1632 = vsel %vm961, %v1616, %v1631
      %v1633 = vrot.slane %v784, 4
      %v1634 = vsel %vm961, %v1633, %v758
      %v1635 = vrot.slane %v758, 4
      %v1636 = vsel %vm961, %v784, %v1635
      %v1638 = vunpack.c.l.s4 1983009808
      %v1639 = vunpack.c.0.s8 %v1638
      %v1640 = vperm.slane %v1634, %v1639
      %v1642 = vunpack.c.l.s4 1983009808
      %v1643 = vunpack.c.0.s8 %v1642
      %v1644 = vperm.slane %v1636, %v1643
      %v1645 = vrot.slane %v797, 4
      %v1646 = vsel %vm961, %v1645, %v771
      %v1647 = vrot.slane %v771, 4
      %v1648 = vsel %vm961, %v797, %v1647
      %v1650 = vunpack.c.l.s4 1983009808
      %v1651 = vunpack.c.0.s8 %v1650
      %v1652 = vperm.slane %v1646, %v1651
      %v1654 = vunpack.c.l.s4 1983009808
      %v1655 = vunpack.c.0.s8 %v1654
      %v1656 = vperm.slane %v1648, %v1655
      %v1657 = vrot.slane %v836, 4
      %v1658 = vsel %vm961, %v1657, %v810
      %v1659 = vrot.slane %v810, 4
      %v1660 = vsel %vm961, %v836, %v1659
      %v1662 = vunpack.c.l.s4 1983009808
      %v1663 = vunpack.c.0.s8 %v1662
      %v1664 = vperm.slane %v1658, %v1663
      %v1666 = vunpack.c.l.s4 1983009808
      %v1667 = vunpack.c.0.s8 %v1666
      %v1668 = vperm.slane %v1660, %v1667
      %v1669 = vrot.slane %v849, 4
      %v1670 = vsel %vm961, %v1669, %v823
      %v1671 = vrot.slane %v823, 4
      %v1672 = vsel %vm961, %v849, %v1671
      %v1674 = vunpack.c.l.s4 1983009808
      %v1675 = vunpack.c.0.s8 %v1674
      %v1676 = vperm.slane %v1670, %v1675
      %v1678 = vunpack.c.l.s4 1983009808
      %v1679 = vunpack.c.0.s8 %v1678
      %v1680 = vperm.slane %v1672, %v1679
      %v1681 = vrot.slane %v1652, 4
      %v1682 = vsel %vm961, %v1681, %v1640
      %v1683 = vrot.slane %v1640, 4
      %v1684 = vsel %vm961, %v1652, %v1683
      %v1686 = vunpack.c.l.s4 1934713408
      %v1687 = vunpack.c.0.s8 %v1686
      %v1688 = vperm.slane %v1682, %v1687
      %v1690 = vunpack.c.l.s4 1934713408
      %v1691 = vunpack.c.0.s8 %v1690
      %v1692 = vperm.slane %v1684, %v1691
      %v1693 = vrot.slane %v1656, 4
      %v1694 = vsel %vm961, %v1693, %v1644
      %v1695 = vrot.slane %v1644, 4
      %v1696 = vsel %vm961, %v1656, %v1695
      %v1698 = vunpack.c.l.s4 1934713408
      %v1699 = vunpack.c.0.s8 %v1698
      %v1700 = vperm.slane %v1694, %v1699
      %v1702 = vunpack.c.l.s4 1934713408
      %v1703 = vunpack.c.0.s8 %v1702
      %v1704 = vperm.slane %v1696, %v1703
      %v1705 = vrot.slane %v1676, 4
      %v1706 = vsel %vm961, %v1705, %v1664
      %v1707 = vrot.slane %v1664, 4
      %v1708 = vsel %vm961, %v1676, %v1707
      %v1710 = vunpack.c.l.s4 1934713408
      %v1711 = vunpack.c.0.s8 %v1710
      %v1712 = vperm.slane %v1706, %v1711
      %v1714 = vunpack.c.l.s4 1934713408
      %v1715 = vunpack.c.0.s8 %v1714
      %v1716 = vperm.slane %v1708, %v1715
      %v1717 = vrot.slane %v1680, 4
      %v1718 = vsel %vm961, %v1717, %v1668
      %v1719 = vrot.slane %v1668, 4
      %v1720 = vsel %vm961, %v1680, %v1719
      %v1722 = vunpack.c.l.s4 1934713408
      %v1723 = vunpack.c.0.s8 %v1722
      %v1724 = vperm.slane %v1718, %v1723
      %v1726 = vunpack.c.l.s4 1934713408
      %v1727 = vunpack.c.0.s8 %v1726
      %v1728 = vperm.slane %v1720, %v1727
      %v1729 = vrot.slane %v1712, 4
      %v1730 = vsel %vm961, %v1729, %v1688
      %v1731 = vrot.slane %v1688, 4
      %v1732 = vsel %vm961, %v1712, %v1731
      %v1733 = vrot.slane %v1716, 4
      %v1734 = vsel %vm961, %v1733, %v1692
      %v1735 = vrot.slane %v1692, 4
      %v1736 = vsel %vm961, %v1716, %v1735
      %v1737 = vrot.slane %v1724, 4
      %v1738 = vsel %vm961, %v1737, %v1700
      %v1739 = vrot.slane %v1700, 4
      %v1740 = vsel %vm961, %v1724, %v1739
      %v1741 = vrot.slane %v1728, 4
      %v1742 = vsel %vm961, %v1741, %v1704
      %v1743 = vrot.slane %v1704, 4
      %v1744 = vsel %vm961, %v1728, %v1743
      %v1745 = vrot.slane %v888, 4
      %v1746 = vsel %vm961, %v1745, %v862
      %v1747 = vrot.slane %v862, 4
      %v1748 = vsel %vm961, %v888, %v1747
      %v1750 = vunpack.c.l.s4 1983009808
      %v1751 = vunpack.c.0.s8 %v1750
      %v1752 = vperm.slane %v1746, %v1751
      %v1754 = vunpack.c.l.s4 1983009808
      %v1755 = vunpack.c.0.s8 %v1754
      %v1756 = vperm.slane %v1748, %v1755
      %v1757 = vrot.slane %v901, 4
      %v1758 = vsel %vm961, %v1757, %v875
      %v1759 = vrot.slane %v875, 4
      %v1760 = vsel %vm961, %v901, %v1759
      %v1762 = vunpack.c.l.s4 1983009808
      %v1763 = vunpack.c.0.s8 %v1762
      %v1764 = vperm.slane %v1758, %v1763
      %v1766 = vunpack.c.l.s4 1983009808
      %v1767 = vunpack.c.0.s8 %v1766
      %v1768 = vperm.slane %v1760, %v1767
      %v1769 = vrot.slane %v940, 4
      %v1770 = vsel %vm961, %v1769, %v914
      %v1771 = vrot.slane %v914, 4
      %v1772 = vsel %vm961, %v940, %v1771
      %v1774 = vunpack.c.l.s4 1983009808
      %v1775 = vunpack.c.0.s8 %v1774
      %v1776 = vperm.slane %v1770, %v1775
      %v1778 = vunpack.c.l.s4 1983009808
      %v1779 = vunpack.c.0.s8 %v1778
      %v1780 = vperm.slane %v1772, %v1779
      %v1781 = vrot.slane %v953, 4
      %v1782 = vsel %vm961, %v1781, %v927
      %v1783 = vrot.slane %v927, 4
      %v1784 = vsel %vm961, %v953, %v1783
      %v1786 = vunpack.c.l.s4 1983009808
      %v1787 = vunpack.c.0.s8 %v1786
      %v1788 = vperm.slane %v1782, %v1787
      %v1790 = vunpack.c.l.s4 1983009808
      %v1791 = vunpack.c.0.s8 %v1790
      %v1792 = vperm.slane %v1784, %v1791
      %v1793 = vrot.slane %v1764, 4
      %v1794 = vsel %vm961, %v1793, %v1752
      %v1795 = vrot.slane %v1752, 4
      %v1796 = vsel %vm961, %v1764, %v1795
      %v1798 = vunpack.c.l.s4 1934713408
      %v1799 = vunpack.c.0.s8 %v1798
      %v1800 = vperm.slane %v1794, %v1799
      %v1802 = vunpack.c.l.s4 1934713408
      %v1803 = vunpack.c.0.s8 %v1802
      %v1804 = vperm.slane %v1796, %v1803
      %v1805 = vrot.slane %v1768, 4
      %v1806 = vsel %vm961, %v1805, %v1756
      %v1807 = vrot.slane %v1756, 4
      %v1808 = vsel %vm961, %v1768, %v1807
      %v1810 = vunpack.c.l.s4 1934713408
      %v1811 = vunpack.c.0.s8 %v1810
      %v1812 = vperm.slane %v1806, %v1811
      %v1814 = vunpack.c.l.s4 1934713408
      %v1815 = vunpack.c.0.s8 %v1814
      %v1816 = vperm.slane %v1808, %v1815
      %v1817 = vrot.slane %v1788, 4
      %v1818 = vsel %vm961, %v1817, %v1776
      %v1819 = vrot.slane %v1776, 4
      %v1820 = vsel %vm961, %v1788, %v1819
      %v1822 = vunpack.c.l.s4 1934713408
      %v1823 = vunpack.c.0.s8 %v1822
      %v1824 = vperm.slane %v1818, %v1823
      %v1826 = vunpack.c.l.s4 1934713408
      %v1827 = vunpack.c.0.s8 %v1826
      %v1828 = vperm.slane %v1820, %v1827
      %v1829 = vrot.slane %v1792, 4
      %v1830 = vsel %vm961, %v1829, %v1780
      %v1831 = vrot.slane %v1780, 4
      %v1832 = vsel %vm961, %v1792, %v1831
      %v1834 = vunpack.c.l.s4 1934713408
      %v1835 = vunpack.c.0.s8 %v1834
      %v1836 = vperm.slane %v1830, %v1835
      %v1838 = vunpack.c.l.s4 1934713408
      %v1839 = vunpack.c.0.s8 %v1838
      %v1840 = vperm.slane %v1832, %v1839
      %v1841 = vrot.slane %v1824, 4
      %v1842 = vsel %vm961, %v1841, %v1800
      %v1843 = vrot.slane %v1800, 4
      %v1844 = vsel %vm961, %v1824, %v1843
      %v1845 = vrot.slane %v1828, 4
      %v1846 = vsel %vm961, %v1845, %v1804
      %v1847 = vrot.slane %v1804, 4
      %v1848 = vsel %vm961, %v1828, %v1847
      %v1849 = vrot.slane %v1836, 4
      %v1850 = vsel %vm961, %v1849, %v1812
      %v1851 = vrot.slane %v1812, 4
      %v1852 = vsel %vm961, %v1836, %v1851
      %v1853 = vrot.slane %v1840, 4
      %v1854 = vsel %vm961, %v1853, %v1816
      %v1855 = vrot.slane %v1816, 4
      %v1856 = vsel %vm961, %v1840, %v1855
      %v1857 = vrot.slane %v166, 4
      %v1858 = vsel %vm961, %v1857, %v140
      %v1859 = vrot.slane %v140, 4
      %v1860 = vsel %vm961, %v166, %v1859
      %v1862 = vunpack.c.l.s4 1983009808
      %v1863 = vunpack.c.0.s8 %v1862
      %v1864 = vperm.slane %v1858, %v1863
      %v1866 = vunpack.c.l.s4 1983009808
      %v1867 = vunpack.c.0.s8 %v1866
      %v1868 = vperm.slane %v1860, %v1867
      %v1869 = vrot.slane %v179, 4
      %v1870 = vsel %vm961, %v1869, %v153
      %v1871 = vrot.slane %v153, 4
      %v1872 = vsel %vm961, %v179, %v1871
      %v1874 = vunpack.c.l.s4 1983009808
      %v1875 = vunpack.c.0.s8 %v1874
      %v1876 = vperm.slane %v1870, %v1875
      %v1878 = vunpack.c.l.s4 1983009808
      %v1879 = vunpack.c.0.s8 %v1878
      %v1880 = vperm.slane %v1872, %v1879
      %v1881 = vrot.slane %v218, 4
      %v1882 = vsel %vm961, %v1881, %v192
      %v1883 = vrot.slane %v192, 4
      %v1884 = vsel %vm961, %v218, %v1883
      %v1886 = vunpack.c.l.s4 1983009808
      %v1887 = vunpack.c.0.s8 %v1886
      %v1888 = vperm.slane %v1882, %v1887
      %v1890 = vunpack.c.l.s4 1983009808
      %v1891 = vunpack.c.0.s8 %v1890
      %v1892 = vperm.slane %v1884, %v1891
      %v1893 = vrot.slane %v231, 4
      %v1894 = vsel %vm961, %v1893, %v205
      %v1895 = vrot.slane %v205, 4
      %v1896 = vsel %vm961, %v231, %v1895
      %v1898 = vunpack.c.l.s4 1983009808
      %v1899 = vunpack.c.0.s8 %v1898
      %v1900 = vperm.slane %v1894, %v1899
      %v1902 = vunpack.c.l.s4 1983009808
      %v1903 = vunpack.c.0.s8 %v1902
      %v1904 = vperm.slane %v1896, %v1903
      %v1905 = vrot.slane %v1876, 4
      %v1906 = vsel %vm961, %v1905, %v1864
      %v1907 = vrot.slane %v1864, 4
      %v1908 = vsel %vm961, %v1876, %v1907
      %v1910 = vunpack.c.l.s4 1934713408
      %v1911 = vunpack.c.0.s8 %v1910
      %v1912 = vperm.slane %v1906, %v1911
      %v1914 = vunpack.c.l.s4 1934713408
      %v1915 = vunpack.c.0.s8 %v1914
      %v1916 = vperm.slane %v1908, %v1915
      %v1917 = vrot.slane %v1880, 4
      %v1918 = vsel %vm961, %v1917, %v1868
      %v1919 = vrot.slane %v1868, 4
      %v1920 = vsel %vm961, %v1880, %v1919
      %v1922 = vunpack.c.l.s4 1934713408
      %v1923 = vunpack.c.0.s8 %v1922
      %v1924 = vperm.slane %v1918, %v1923
      %v1926 = vunpack.c.l.s4 1934713408
      %v1927 = vunpack.c.0.s8 %v1926
      %v1928 = vperm.slane %v1920, %v1927
      %v1929 = vrot.slane %v1900, 4
      %v1930 = vsel %vm961, %v1929, %v1888
      %v1931 = vrot.slane %v1888, 4
      %v1932 = vsel %vm961, %v1900, %v1931
      %v1934 = vunpack.c.l.s4 1934713408
      %v1935 = vunpack.c.0.s8 %v1934
      %v1936 = vperm.slane %v1930, %v1935
      %v1938 = vunpack.c.l.s4 1934713408
      %v1939 = vunpack.c.0.s8 %v1938
      %v1940 = vperm.slane %v1932, %v1939
      %v1941 = vrot.slane %v1904, 4
      %v1942 = vsel %vm961, %v1941, %v1892
      %v1943 = vrot.slane %v1892, 4
      %v1944 = vsel %vm961, %v1904, %v1943
      %v1946 = vunpack.c.l.s4 1934713408
      %v1947 = vunpack.c.0.s8 %v1946
      %v1948 = vperm.slane %v1942, %v1947
      %v1950 = vunpack.c.l.s4 1934713408
      %v1951 = vunpack.c.0.s8 %v1950
      %v1952 = vperm.slane %v1944, %v1951
      %v1953 = vrot.slane %v1936, 4
      %v1954 = vsel %vm961, %v1953, %v1912
      %v1955 = vrot.slane %v1912, 4
      %v1956 = vsel %vm961, %v1936, %v1955
      %v1957 = vrot.slane %v1940, 4
      %v1958 = vsel %vm961, %v1957, %v1916
      %v1959 = vrot.slane %v1916, 4
      %v1960 = vsel %vm961, %v1940, %v1959
      %v1961 = vrot.slane %v1948, 4
      %v1962 = vsel %vm961, %v1961, %v1924
      %v1963 = vrot.slane %v1924, 4
      %v1964 = vsel %vm961, %v1948, %v1963
      %v1965 = vrot.slane %v1952, 4
      %v1966 = vsel %vm961, %v1965, %v1928
      %v1967 = vrot.slane %v1928, 4
      %v1968 = vsel %vm961, %v1952, %v1967
      %v1969 = vrot.slane %v270, 4
      %v1970 = vsel %vm961, %v1969, %v244
      %v1971 = vrot.slane %v244, 4
      %v1972 = vsel %vm961, %v270, %v1971
      %v1974 = vunpack.c.l.s4 1983009808
      %v1975 = vunpack.c.0.s8 %v1974
      %v1976 = vperm.slane %v1970, %v1975
      %v1978 = vunpack.c.l.s4 1983009808
      %v1979 = vunpack.c.0.s8 %v1978
      %v1980 = vperm.slane %v1972, %v1979
      %v1981 = vrot.slane %v283, 4
      %v1982 = vsel %vm961, %v1981, %v257
      %v1983 = vrot.slane %v257, 4
      %v1984 = vsel %vm961, %v283, %v1983
      %v1986 = vunpack.c.l.s4 1983009808
      %v1987 = vunpack.c.0.s8 %v1986
      %v1988 = vperm.slane %v1982, %v1987
      %v1990 = vunpack.c.l.s4 1983009808
      %v1991 = vunpack.c.0.s8 %v1990
      %v1992 = vperm.slane %v1984, %v1991
      %v1993 = vrot.slane %v322, 4
      %v1994 = vsel %vm961, %v1993, %v296
      %v1995 = vrot.slane %v296, 4
      %v1996 = vsel %vm961, %v322, %v1995
      %v1998 = vunpack.c.l.s4 1983009808
      %v1999 = vunpack.c.0.s8 %v1998
      %v2000 = vperm.slane %v1994, %v1999
      %v2002 = vunpack.c.l.s4 1983009808
      %v2003 = vunpack.c.0.s8 %v2002
      %v2004 = vperm.slane %v1996, %v2003
      %v2005 = vrot.slane %v335, 4
      %v2006 = vsel %vm961, %v2005, %v309
      %v2007 = vrot.slane %v309, 4
      %v2008 = vsel %vm961, %v335, %v2007
      %v2010 = vunpack.c.l.s4 1983009808
      %v2011 = vunpack.c.0.s8 %v2010
      %v2012 = vperm.slane %v2006, %v2011
      %v2014 = vunpack.c.l.s4 1983009808
      %v2015 = vunpack.c.0.s8 %v2014
      %v2016 = vperm.slane %v2008, %v2015
      %v2017 = vrot.slane %v1988, 4
      %v2018 = vsel %vm961, %v2017, %v1976
      %v2019 = vrot.slane %v1976, 4
      %v2020 = vsel %vm961, %v1988, %v2019
      %v2022 = vunpack.c.l.s4 1934713408
      %v2023 = vunpack.c.0.s8 %v2022
      %v2024 = vperm.slane %v2018, %v2023
      %v2026 = vunpack.c.l.s4 1934713408
      %v2027 = vunpack.c.0.s8 %v2026
      %v2028 = vperm.slane %v2020, %v2027
      %v2029 = vrot.slane %v1992, 4
      %v2030 = vsel %vm961, %v2029, %v1980
      %v2031 = vrot.slane %v1980, 4
      %v2032 = vsel %vm961, %v1992, %v2031
      %v2034 = vunpack.c.l.s4 1934713408
      %v2035 = vunpack.c.0.s8 %v2034
      %v2036 = vperm.slane %v2030, %v2035
      %v2038 = vunpack.c.l.s4 1934713408
      %v2039 = vunpack.c.0.s8 %v2038
      %v2040 = vperm.slane %v2032, %v2039
      %v2041 = vrot.slane %v2012, 4
      %v2042 = vsel %vm961, %v2041, %v2000
      %v2043 = vrot.slane %v2000, 4
      %v2044 = vsel %vm961, %v2012, %v2043
      %v2046 = vunpack.c.l.s4 1934713408
      %v2047 = vunpack.c.0.s8 %v2046
      %v2048 = vperm.slane %v2042, %v2047
      %v2050 = vunpack.c.l.s4 1934713408
      %v2051 = vunpack.c.0.s8 %v2050
      %v2052 = vperm.slane %v2044, %v2051
      %v2053 = vrot.slane %v2016, 4
      %v2054 = vsel %vm961, %v2053, %v2004
      %v2055 = vrot.slane %v2004, 4
      %v2056 = vsel %vm961, %v2016, %v2055
      %v2058 = vunpack.c.l.s4 1934713408
      %v2059 = vunpack.c.0.s8 %v2058
      %v2060 = vperm.slane %v2054, %v2059
      %v2062 = vunpack.c.l.s4 1934713408
      %v2063 = vunpack.c.0.s8 %v2062
      %v2064 = vperm.slane %v2056, %v2063
      %v2065 = vrot.slane %v2048, 4
      %v2066 = vsel %vm961, %v2065, %v2024
      %v2067 = vrot.slane %v2024, 4
      %v2068 = vsel %vm961, %v2048, %v2067
      %v2069 = vrot.slane %v2052, 4
      %v2070 = vsel %vm961, %v2069, %v2028
      %v2071 = vrot.slane %v2028, 4
      %v2072 = vsel %vm961, %v2052, %v2071
      %v2073 = vrot.slane %v2060, 4
      %v2074 = vsel %vm961, %v2073, %v2036
      %v2075 = vrot.slane %v2036, 4
      %v2076 = vsel %vm961, %v2060, %v2075
      %v2077 = vrot.slane %v2064, 4
      %v2078 = vsel %vm961, %v2077, %v2040
      %v2079 = vrot.slane %v2040, 4
      %v2080 = vsel %vm961, %v2064, %v2079
      %v2081 = vrot.slane %v374, 4
      %v2082 = vsel %vm961, %v2081, %v348
      %v2083 = vrot.slane %v348, 4
      %v2084 = vsel %vm961, %v374, %v2083
      %v2086 = vunpack.c.l.s4 1983009808
      %v2087 = vunpack.c.0.s8 %v2086
      %v2088 = vperm.slane %v2082, %v2087
      %v2090 = vunpack.c.l.s4 1983009808
      %v2091 = vunpack.c.0.s8 %v2090
      %v2092 = vperm.slane %v2084, %v2091
      %v2093 = vrot.slane %v387, 4
      %v2094 = vsel %vm961, %v2093, %v361
      %v2095 = vrot.slane %v361, 4
      %v2096 = vsel %vm961, %v387, %v2095
      %v2098 = vunpack.c.l.s4 1983009808
      %v2099 = vunpack.c.0.s8 %v2098
      %v2100 = vperm.slane %v2094, %v2099
      %v2102 = vunpack.c.l.s4 1983009808
      %v2103 = vunpack.c.0.s8 %v2102
      %v2104 = vperm.slane %v2096, %v2103
      %v2105 = vrot.slane %v426, 4
      %v2106 = vsel %vm961, %v2105, %v400
      %v2107 = vrot.slane %v400, 4
      %v2108 = vsel %vm961, %v426, %v2107
      %v2110 = vunpack.c.l.s4 1983009808
      %v2111 = vunpack.c.0.s8 %v2110
      %v2112 = vperm.slane %v2106, %v2111
      %v2114 = vunpack.c.l.s4 1983009808
      %v2115 = vunpack.c.0.s8 %v2114
      %v2116 = vperm.slane %v2108, %v2115
      %v2117 = vrot.slane %v439, 4
      %v2118 = vsel %vm961, %v2117, %v413
      %v2119 = vrot.slane %v413, 4
      %v2120 = vsel %vm961, %v439, %v2119
      %v2122 = vunpack.c.l.s4 1983009808
      %v2123 = vunpack.c.0.s8 %v2122
      %v2124 = vperm.slane %v2118, %v2123
      %v2126 = vunpack.c.l.s4 1983009808
      %v2127 = vunpack.c.0.s8 %v2126
      %v2128 = vperm.slane %v2120, %v2127
      %v2129 = vrot.slane %v2100, 4
      %v2130 = vsel %vm961, %v2129, %v2088
      %v2131 = vrot.slane %v2088, 4
      %v2132 = vsel %vm961, %v2100, %v2131
      %v2134 = vunpack.c.l.s4 1934713408
      %v2135 = vunpack.c.0.s8 %v2134
      %v2136 = vperm.slane %v2130, %v2135
      %v2138 = vunpack.c.l.s4 1934713408
      %v2139 = vunpack.c.0.s8 %v2138
      %v2140 = vperm.slane %v2132, %v2139
      %v2141 = vrot.slane %v2104, 4
      %v2142 = vsel %vm961, %v2141, %v2092
      %v2143 = vrot.slane %v2092, 4
      %v2144 = vsel %vm961, %v2104, %v2143
      %v2146 = vunpack.c.l.s4 1934713408
      %v2147 = vunpack.c.0.s8 %v2146
      %v2148 = vperm.slane %v2142, %v2147
      %v2150 = vunpack.c.l.s4 1934713408
      %v2151 = vunpack.c.0.s8 %v2150
      %v2152 = vperm.slane %v2144, %v2151
      %v2153 = vrot.slane %v2124, 4
      %v2154 = vsel %vm961, %v2153, %v2112
      %v2155 = vrot.slane %v2112, 4
      %v2156 = vsel %vm961, %v2124, %v2155
      %v2158 = vunpack.c.l.s4 1934713408
      %v2159 = vunpack.c.0.s8 %v2158
      %v2160 = vperm.slane %v2154, %v2159
      %v2162 = vunpack.c.l.s4 1934713408
      %v2163 = vunpack.c.0.s8 %v2162
      %v2164 = vperm.slane %v2156, %v2163
      %v2165 = vrot.slane %v2128, 4
      %v2166 = vsel %vm961, %v2165, %v2116
      %v2167 = vrot.slane %v2116, 4
      %v2168 = vsel %vm961, %v2128, %v2167
      %v2170 = vunpack.c.l.s4 1934713408
      %v2171 = vunpack.c.0.s8 %v2170
      %v2172 = vperm.slane %v2166, %v2171
      %v2174 = vunpack.c.l.s4 1934713408
      %v2175 = vunpack.c.0.s8 %v2174
      %v2176 = vperm.slane %v2168, %v2175
      %v2177 = vrot.slane %v2160, 4
      %v2178 = vsel %vm961, %v2177, %v2136
      %v2179 = vrot.slane %v2136, 4
      %v2180 = vsel %vm961, %v2160, %v2179
      %v2181 = vrot.slane %v2164, 4
      %v2182 = vsel %vm961, %v2181, %v2140
      %v2183 = vrot.slane %v2140, 4
      %v2184 = vsel %vm961, %v2164, %v2183
      %v2185 = vrot.slane %v2172, 4
      %v2186 = vsel %vm961, %v2185, %v2148
      %v2187 = vrot.slane %v2148, 4
      %v2188 = vsel %vm961, %v2172, %v2187
      %v2189 = vrot.slane %v2176, 4
      %v2190 = vsel %vm961, %v2189, %v2152
      %v2191 = vrot.slane %v2152, 4
      %v2192 = vsel %vm961, %v2176, %v2191
      %v2193 = vrot.slane %v478, 4
      %v2194 = vsel %vm961, %v2193, %v452
      %v2195 = vrot.slane %v452, 4
      %v2196 = vsel %vm961, %v478, %v2195
      %v2198 = vunpack.c.l.s4 1983009808
      %v2199 = vunpack.c.0.s8 %v2198
      %v2200 = vperm.slane %v2194, %v2199
      %v2202 = vunpack.c.l.s4 1983009808
      %v2203 = vunpack.c.0.s8 %v2202
      %v2204 = vperm.slane %v2196, %v2203
      %v2205 = vrot.slane %v491, 4
      %v2206 = vsel %vm961, %v2205, %v465
      %v2207 = vrot.slane %v465, 4
      %v2208 = vsel %vm961, %v491, %v2207
      %v2210 = vunpack.c.l.s4 1983009808
      %v2211 = vunpack.c.0.s8 %v2210
      %v2212 = vperm.slane %v2206, %v2211
      %v2214 = vunpack.c.l.s4 1983009808
      %v2215 = vunpack.c.0.s8 %v2214
      %v2216 = vperm.slane %v2208, %v2215
      %v2217 = vrot.slane %v530, 4
      %v2218 = vsel %vm961, %v2217, %v504
      %v2219 = vrot.slane %v504, 4
      %v2220 = vsel %vm961, %v530, %v2219
      %v2222 = vunpack.c.l.s4 1983009808
      %v2223 = vunpack.c.0.s8 %v2222
      %v2224 = vperm.slane %v2218, %v2223
      %v2226 = vunpack.c.l.s4 1983009808
      %v2227 = vunpack.c.0.s8 %v2226
      %v2228 = vperm.slane %v2220, %v2227
      %v2229 = vrot.slane %v543, 4
      %v2230 = vsel %vm961, %v2229, %v517
      %v2231 = vrot.slane %v517, 4
      %v2232 = vsel %vm961, %v543, %v2231
      %v2234 = vunpack.c.l.s4 1983009808
      %v2235 = vunpack.c.0.s8 %v2234
      %v2236 = vperm.slane %v2230, %v2235
      %v2238 = vunpack.c.l.s4 1983009808
      %v2239 = vunpack.c.0.s8 %v2238
      %v2240 = vperm.slane %v2232, %v2239
      %v2241 = vrot.slane %v2212, 4
      %v2242 = vsel %vm961, %v2241, %v2200
      %v2243 = vrot.slane %v2200, 4
      %v2244 = vsel %vm961, %v2212, %v2243
      %v2246 = vunpack.c.l.s4 1934713408
      %v2247 = vunpack.c.0.s8 %v2246
      %v2248 = vperm.slane %v2242, %v2247
      %v2250 = vunpack.c.l.s4 1934713408
      %v2251 = vunpack.c.0.s8 %v2250
      %v2252 = vperm.slane %v2244, %v2251
      %v2253 = vrot.slane %v2216, 4
      %v2254 = vsel %vm961, %v2253, %v2204
      %v2255 = vrot.slane %v2204, 4
      %v2256 = vsel %vm961, %v2216, %v2255
      %v2258 = vunpack.c.l.s4 1934713408
      %v2259 = vunpack.c.0.s8 %v2258
      %v2260 = vperm.slane %v2254, %v2259
      %v2262 = vunpack.c.l.s4 1934713408
      %v2263 = vunpack.c.0.s8 %v2262
      %v2264 = vperm.slane %v2256, %v2263
      %v2265 = vrot.slane %v2236, 4
      %v2266 = vsel %vm961, %v2265, %v2224
      %v2267 = vrot.slane %v2224, 4
      %v2268 = vsel %vm961, %v2236, %v2267
      %v2270 = vunpack.c.l.s4 1934713408
      %v2271 = vunpack.c.0.s8 %v2270
      %v2272 = vperm.slane %v2266, %v2271
      %v2274 = vunpack.c.l.s4 1934713408
      %v2275 = vunpack.c.0.s8 %v2274
      %v2276 = vperm.slane %v2268, %v2275
      %v2277 = vrot.slane %v2240, 4
      %v2278 = vsel %vm961, %v2277, %v2228
      %v2279 = vrot.slane %v2228, 4
      %v2280 = vsel %vm961, %v2240, %v2279
      %v2282 = vunpack.c.l.s4 1934713408
      %v2283 = vunpack.c.0.s8 %v2282
      %v2284 = vperm.slane %v2278, %v2283
      %v2286 = vunpack.c.l.s4 1934713408
      %v2287 = vunpack.c.0.s8 %v2286
      %v2288 = vperm.slane %v2280, %v2287
      %v2289 = vrot.slane %v2272, 4
      %v2290 = vsel %vm961, %v2289, %v2248
      %v2291 = vrot.slane %v2248, 4
      %v2292 = vsel %vm961, %v2272, %v2291
      %v2293 = vrot.slane %v2276, 4
      %v2294 = vsel %vm961, %v2293, %v2252
      %v2295 = vrot.slane %v2252, 4
      %v2296 = vsel %vm961, %v2276, %v2295
      %v2297 = vrot.slane %v2284, 4
      %v2298 = vsel %vm961, %v2297, %v2260
      %v2299 = vrot.slane %v2260, 4
      %v2300 = vsel %vm961, %v2284, %v2299
      %v2301 = vrot.slane %v2288, 4
      %v2302 = vsel %vm961, %v2301, %v2264
      %v2303 = vrot.slane %v2264, 4
      %v2304 = vsel %vm961, %v2288, %v2303
      %v2305 = vrot.slane %v582, 4
      %v2306 = vsel %vm961, %v2305, %v556
      %v2307 = vrot.slane %v556, 4
      %v2308 = vsel %vm961, %v582, %v2307
      %v2310 = vunpack.c.l.s4 1983009808
      %v2311 = vunpack.c.0.s8 %v2310
      %v2312 = vperm.slane %v2306, %v2311
      %v2314 = vunpack.c.l.s4 1983009808
      %v2315 = vunpack.c.0.s8 %v2314
      %v2316 = vperm.slane %v2308, %v2315
      %v2317 = vrot.slane %v595, 4
      %v2318 = vsel %vm961, %v2317, %v569
      %v2319 = vrot.slane %v569, 4
      %v2320 = vsel %vm961, %v595, %v2319
      %v2322 = vunpack.c.l.s4 1983009808
      %v2323 = vunpack.c.0.s8 %v2322
      %v2324 = vperm.slane %v2318, %v2323
      %v2326 = vunpack.c.l.s4 1983009808
      %v2327 = vunpack.c.0.s8 %v2326
      %v2328 = vperm.slane %v2320, %v2327
      %v2329 = vrot.slane %v634, 4
      %v2330 = vsel %vm961, %v2329, %v608
      %v2331 = vrot.slane %v608, 4
      %v2332 = vsel %vm961, %v634, %v2331
      %v2334 = vunpack.c.l.s4 1983009808
      %v2335 = vunpack.c.0.s8 %v2334
      %v2336 = vperm.slane %v2330, %v2335
      %v2338 = vunpack.c.l.s4 1983009808
      %v2339 = vunpack.c.0.s8 %v2338
      %v2340 = vperm.slane %v2332, %v2339
      %v2341 = vrot.slane %v647, 4
      %v2342 = vsel %vm961, %v2341, %v621
      %v2343 = vrot.slane %v621, 4
      %v2344 = vsel %vm961, %v647, %v2343
      %v2346 = vunpack.c.l.s4 1983009808
      %v2347 = vunpack.c.0.s8 %v2346
      %v2348 = vperm.slane %v2342, %v2347
      %v2350 = vunpack.c.l.s4 1983009808
      %v2351 = vunpack.c.0.s8 %v2350
      %v2352 = vperm.slane %v2344, %v2351
      %v2353 = vrot.slane %v2324, 4
      %v2354 = vsel %vm961, %v2353, %v2312
      %v2355 = vrot.slane %v2312, 4
      %v2356 = vsel %vm961, %v2324, %v2355
      %v2358 = vunpack.c.l.s4 1934713408
      %v2359 = vunpack.c.0.s8 %v2358
      %v2360 = vperm.slane %v2354, %v2359
      %v2362 = vunpack.c.l.s4 1934713408
      %v2363 = vunpack.c.0.s8 %v2362
      %v2364 = vperm.slane %v2356, %v2363
      %v2365 = vrot.slane %v2328, 4
      %v2366 = vsel %vm961, %v2365, %v2316
      %v2367 = vrot.slane %v2316, 4
      %v2368 = vsel %vm961, %v2328, %v2367
      %v2370 = vunpack.c.l.s4 1934713408
      %v2371 = vunpack.c.0.s8 %v2370
      %v2372 = vperm.slane %v2366, %v2371
      %v2374 = vunpack.c.l.s4 1934713408
      %v2375 = vunpack.c.0.s8 %v2374
      %v2376 = vperm.slane %v2368, %v2375
      %v2377 = vrot.slane %v2348, 4
      %v2378 = vsel %vm961, %v2377, %v2336
      %v2379 = vrot.slane %v2336, 4
      %v2380 = vsel %vm961, %v2348, %v2379
      %v2382 = vunpack.c.l.s4 1934713408
      %v2383 = vunpack.c.0.s8 %v2382
      %v2384 = vperm.slane %v2378, %v2383
      %v2386 = vunpack.c.l.s4 1934713408
      %v2387 = vunpack.c.0.s8 %v2386
      %v2388 = vperm.slane %v2380, %v2387
      %v2389 = vrot.slane %v2352, 4
      %v2390 = vsel %vm961, %v2389, %v2340
      %v2391 = vrot.slane %v2340, 4
      %v2392 = vsel %vm961, %v2352, %v2391
      %v2394 = vunpack.c.l.s4 1934713408
      %v2395 = vunpack.c.0.s8 %v2394
      %v2396 = vperm.slane %v2390, %v2395
      %v2398 = vunpack.c.l.s4 1934713408
      %v2399 = vunpack.c.0.s8 %v2398
      %v2400 = vperm.slane %v2392, %v2399
      %v2401 = vrot.slane %v2384, 4
      %v2402 = vsel %vm961, %v2401, %v2360
      %v2403 = vrot.slane %v2360, 4
      %v2404 = vsel %vm961, %v2384, %v2403
      %v2405 = vrot.slane %v2388, 4
      %v2406 = vsel %vm961, %v2405, %v2364
      %v2407 = vrot.slane %v2364, 4
      %v2408 = vsel %vm961, %v2388, %v2407
      %v2409 = vrot.slane %v2396, 4
      %v2410 = vsel %vm961, %v2409, %v2372
      %v2411 = vrot.slane %v2372, 4
      %v2412 = vsel %vm961, %v2396, %v2411
      %v2413 = vrot.slane %v2400, 4
      %v2414 = vsel %vm961, %v2413, %v2376
      %v2415 = vrot.slane %v2376, 4
      %v2416 = vsel %vm961, %v2400, %v2415
      %v2417 = vrot.slane %v686, 4
      %v2418 = vsel %vm961, %v2417, %v660
      %v2419 = vrot.slane %v660, 4
      %v2420 = vsel %vm961, %v686, %v2419
      %v2422 = vunpack.c.l.s4 1983009808
      %v2423 = vunpack.c.0.s8 %v2422
      %v2424 = vperm.slane %v2418, %v2423
      %v2426 = vunpack.c.l.s4 1983009808
      %v2427 = vunpack.c.0.s8 %v2426
      %v2428 = vperm.slane %v2420, %v2427
      %v2429 = vrot.slane %v699, 4
      %v2430 = vsel %vm961, %v2429, %v673
      %v2431 = vrot.slane %v673, 4
      %v2432 = vsel %vm961, %v699, %v2431
      %v2434 = vunpack.c.l.s4 1983009808
      %v2435 = vunpack.c.0.s8 %v2434
      %v2436 = vperm.slane %v2430, %v2435
      %v2438 = vunpack.c.l.s4 1983009808
      %v2439 = vunpack.c.0.s8 %v2438
      %v2440 = vperm.slane %v2432, %v2439
      %v2441 = vrot.slane %v738, 4
      %v2442 = vsel %vm961, %v2441, %v712
      %v2443 = vrot.slane %v712, 4
      %v2444 = vsel %vm961, %v738, %v2443
      %v2446 = vunpack.c.l.s4 1983009808
      %v2447 = vunpack.c.0.s8 %v2446
      %v2448 = vperm.slane %v2442, %v2447
      %v2450 = vunpack.c.l.s4 1983009808
      %v2451 = vunpack.c.0.s8 %v2450
      %v2452 = vperm.slane %v2444, %v2451
      %v2453 = vrot.slane %v751, 4
      %v2454 = vsel %vm961, %v2453, %v725
      %v2455 = vrot.slane %v725, 4
      %v2456 = vsel %vm961, %v751, %v2455
      %v2458 = vunpack.c.l.s4 1983009808
      %v2459 = vunpack.c.0.s8 %v2458
      %v2460 = vperm.slane %v2454, %v2459
      %v2462 = vunpack.c.l.s4 1983009808
      %v2463 = vunpack.c.0.s8 %v2462
      %v2464 = vperm.slane %v2456, %v2463
      %v2465 = vrot.slane %v2436, 4
      %v2466 = vsel %vm961, %v2465, %v2424
      %v2467 = vrot.slane %v2424, 4
      %v2468 = vsel %vm961, %v2436, %v2467
      %v2470 = vunpack.c.l.s4 1934713408
      %v2471 = vunpack.c.0.s8 %v2470
      %v2472 = vperm.slane %v2466, %v2471
      %v2474 = vunpack.c.l.s4 1934713408
      %v2475 = vunpack.c.0.s8 %v2474
      %v2476 = vperm.slane %v2468, %v2475
      %v2477 = vrot.slane %v2440, 4
      %v2478 = vsel %vm961, %v2477, %v2428
      %v2479 = vrot.slane %v2428, 4
      %v2480 = vsel %vm961, %v2440, %v2479
      %v2482 = vunpack.c.l.s4 1934713408
      %v2483 = vunpack.c.0.s8 %v2482
      %v2484 = vperm.slane %v2478, %v2483
      %v2486 = vunpack.c.l.s4 1934713408
      %v2487 = vunpack.c.0.s8 %v2486
      %v2488 = vperm.slane %v2480, %v2487
      %v2489 = vrot.slane %v2460, 4
      %v2490 = vsel %vm961, %v2489, %v2448
      %v2491 = vrot.slane %v2448, 4
      %v2492 = vsel %vm961, %v2460, %v2491
      %v2494 = vunpack.c.l.s4 1934713408
      %v2495 = vunpack.c.0.s8 %v2494
      %v2496 = vperm.slane %v2490, %v2495
      %v2498 = vunpack.c.l.s4 1934713408
      %v2499 = vunpack.c.0.s8 %v2498
      %v2500 = vperm.slane %v2492, %v2499
      %v2501 = vrot.slane %v2464, 4
      %v2502 = vsel %vm961, %v2501, %v2452
      %v2503 = vrot.slane %v2452, 4
      %v2504 = vsel %vm961, %v2464, %v2503
      %v2506 = vunpack.c.l.s4 1934713408
      %v2507 = vunpack.c.0.s8 %v2506
      %v2508 = vperm.slane %v2502, %v2507
      %v2510 = vunpack.c.l.s4 1934713408
      %v2511 = vunpack.c.0.s8 %v2510
      %v2512 = vperm.slane %v2504, %v2511
      %v2513 = vrot.slane %v2496, 4
      %v2514 = vsel %vm961, %v2513, %v2472
      %v2515 = vrot.slane %v2472, 4
      %v2516 = vsel %vm961, %v2496, %v2515
      %v2517 = vrot.slane %v2500, 4
      %v2518 = vsel %vm961, %v2517, %v2476
      %v2519 = vrot.slane %v2476, 4
      %v2520 = vsel %vm961, %v2500, %v2519
      %v2521 = vrot.slane %v2508, 4
      %v2522 = vsel %vm961, %v2521, %v2484
      %v2523 = vrot.slane %v2484, 4
      %v2524 = vsel %vm961, %v2508, %v2523
      %v2525 = vrot.slane %v2512, 4
      %v2526 = vsel %vm961, %v2525, %v2488
      %v2527 = vrot.slane %v2488, 4
      %v2528 = vsel %vm961, %v2512, %v2527
      %v2529 = vrot.slane %v790, 4
      %v2530 = vsel %vm961, %v2529, %v764
      %v2531 = vrot.slane %v764, 4
      %v2532 = vsel %vm961, %v790, %v2531
      %v2534 = vunpack.c.l.s4 1983009808
      %v2535 = vunpack.c.0.s8 %v2534
      %v2536 = vperm.slane %v2530, %v2535
      %v2538 = vunpack.c.l.s4 1983009808
      %v2539 = vunpack.c.0.s8 %v2538
      %v2540 = vperm.slane %v2532, %v2539
      %v2541 = vrot.slane %v803, 4
      %v2542 = vsel %vm961, %v2541, %v777
      %v2543 = vrot.slane %v777, 4
      %v2544 = vsel %vm961, %v803, %v2543
      %v2546 = vunpack.c.l.s4 1983009808
      %v2547 = vunpack.c.0.s8 %v2546
      %v2548 = vperm.slane %v2542, %v2547
      %v2550 = vunpack.c.l.s4 1983009808
      %v2551 = vunpack.c.0.s8 %v2550
      %v2552 = vperm.slane %v2544, %v2551
      %v2553 = vrot.slane %v842, 4
      %v2554 = vsel %vm961, %v2553, %v816
      %v2555 = vrot.slane %v816, 4
      %v2556 = vsel %vm961, %v842, %v2555
      %v2558 = vunpack.c.l.s4 1983009808
      %v2559 = vunpack.c.0.s8 %v2558
      %v2560 = vperm.slane %v2554, %v2559
      %v2562 = vunpack.c.l.s4 1983009808
      %v2563 = vunpack.c.0.s8 %v2562
      %v2564 = vperm.slane %v2556, %v2563
      %v2565 = vrot.slane %v855, 4
      %v2566 = vsel %vm961, %v2565, %v829
      %v2567 = vrot.slane %v829, 4
      %v2568 = vsel %vm961, %v855, %v2567
      %v2570 = vunpack.c.l.s4 1983009808
      %v2571 = vunpack.c.0.s8 %v2570
      %v2572 = vperm.slane %v2566, %v2571
      %v2574 = vunpack.c.l.s4 1983009808
      %v2575 = vunpack.c.0.s8 %v2574
      %v2576 = vperm.slane %v2568, %v2575
      %v2577 = vrot.slane %v2548, 4
      %v2578 = vsel %vm961, %v2577, %v2536
      %v2579 = vrot.slane %v2536, 4
      %v2580 = vsel %vm961, %v2548, %v2579
      %v2582 = vunpack.c.l.s4 1934713408
      %v2583 = vunpack.c.0.s8 %v2582
      %v2584 = vperm.slane %v2578, %v2583
      %v2586 = vunpack.c.l.s4 1934713408
      %v2587 = vunpack.c.0.s8 %v2586
      %v2588 = vperm.slane %v2580, %v2587
      %v2589 = vrot.slane %v2552, 4
      %v2590 = vsel %vm961, %v2589, %v2540
      %v2591 = vrot.slane %v2540, 4
      %v2592 = vsel %vm961, %v2552, %v2591
      %v2594 = vunpack.c.l.s4 1934713408
      %v2595 = vunpack.c.0.s8 %v2594
      %v2596 = vperm.slane %v2590, %v2595
      %v2598 = vunpack.c.l.s4 1934713408
      %v2599 = vunpack.c.0.s8 %v2598
      %v2600 = vperm.slane %v2592, %v2599
      %v2601 = vrot.slane %v2572, 4
      %v2602 = vsel %vm961, %v2601, %v2560
      %v2603 = vrot.slane %v2560, 4
      %v2604 = vsel %vm961, %v2572, %v2603
      %v2606 = vunpack.c.l.s4 1934713408
      %v2607 = vunpack.c.0.s8 %v2606
      %v2608 = vperm.slane %v2602, %v2607
      %v2610 = vunpack.c.l.s4 1934713408
      %v2611 = vunpack.c.0.s8 %v2610
      %v2612 = vperm.slane %v2604, %v2611
      %v2613 = vrot.slane %v2576, 4
      %v2614 = vsel %vm961, %v2613, %v2564
      %v2615 = vrot.slane %v2564, 4
      %v2616 = vsel %vm961, %v2576, %v2615
      %v2618 = vunpack.c.l.s4 1934713408
      %v2619 = vunpack.c.0.s8 %v2618
      %v2620 = vperm.slane %v2614, %v2619
      %v2622 = vunpack.c.l.s4 1934713408
      %v2623 = vunpack.c.0.s8 %v2622
      %v2624 = vperm.slane %v2616, %v2623
      %v2625 = vrot.slane %v2608, 4
      %v2626 = vsel %vm961, %v2625, %v2584
      %v2627 = vrot.slane %v2584, 4
      %v2628 = vsel %vm961, %v2608, %v2627
      %v2629 = vrot.slane %v2612, 4
      %v2630 = vsel %vm961, %v2629, %v2588
      %v2631 = vrot.slane %v2588, 4
      %v2632 = vsel %vm961, %v2612, %v2631
      %v2633 = vrot.slane %v2620, 4
      %v2634 = vsel %vm961, %v2633, %v2596
      %v2635 = vrot.slane %v2596, 4
      %v2636 = vsel %vm961, %v2620, %v2635
      %v2637 = vrot.slane %v2624, 4
      %v2638 = vsel %vm961, %v2637, %v2600
      %v2639 = vrot.slane %v2600, 4
      %v2640 = vsel %vm961, %v2624, %v2639
      %v2641 = vrot.slane %v894, 4
      %v2642 = vsel %vm961, %v2641, %v868
      %v2643 = vrot.slane %v868, 4
      %v2644 = vsel %vm961, %v894, %v2643
      %v2646 = vunpack.c.l.s4 1983009808
      %v2647 = vunpack.c.0.s8 %v2646
      %v2648 = vperm.slane %v2642, %v2647
      %v2650 = vunpack.c.l.s4 1983009808
      %v2651 = vunpack.c.0.s8 %v2650
      %v2652 = vperm.slane %v2644, %v2651
      %v2653 = vrot.slane %v907, 4
      %v2654 = vsel %vm961, %v2653, %v881
      %v2655 = vrot.slane %v881, 4
      %v2656 = vsel %vm961, %v907, %v2655
      %v2658 = vunpack.c.l.s4 1983009808
      %v2659 = vunpack.c.0.s8 %v2658
      %v2660 = vperm.slane %v2654, %v2659
      %v2662 = vunpack.c.l.s4 1983009808
      %v2663 = vunpack.c.0.s8 %v2662
      %v2664 = vperm.slane %v2656, %v2663
      %v2665 = vrot.slane %v946, 4
      %v2666 = vsel %vm961, %v2665, %v920
      %v2667 = vrot.slane %v920, 4
      %v2668 = vsel %vm961, %v946, %v2667
      %v2670 = vunpack.c.l.s4 1983009808
      %v2671 = vunpack.c.0.s8 %v2670
      %v2672 = vperm.slane %v2666, %v2671
      %v2674 = vunpack.c.l.s4 1983009808
      %v2675 = vunpack.c.0.s8 %v2674
      %v2676 = vperm.slane %v2668, %v2675
      %v2677 = vrot.slane %v959, 4
      %v2678 = vsel %vm961, %v2677, %v933
      %v2679 = vrot.slane %v933, 4
      %v2680 = vsel %vm961, %v959, %v2679
      %v2682 = vunpack.c.l.s4 1983009808
      %v2683 = vunpack.c.0.s8 %v2682
      %v2684 = vperm.slane %v2678, %v2683
      %v2686 = vunpack.c.l.s4 1983009808
      %v2687 = vunpack.c.0.s8 %v2686
      %v2688 = vperm.slane %v2680, %v2687
      %v2689 = vrot.slane %v2660, 4
      %v2690 = vsel %vm961, %v2689, %v2648
      %v2691 = vrot.slane %v2648, 4
      %v2692 = vsel %vm961, %v2660, %v2691
      %v2694 = vunpack.c.l.s4 1934713408
      %v2695 = vunpack.c.0.s8 %v2694
      %v2696 = vperm.slane %v2690, %v2695
      %v2698 = vunpack.c.l.s4 1934713408
      %v2699 = vunpack.c.0.s8 %v2698
      %v2700 = vperm.slane %v2692, %v2699
      %v2701 = vrot.slane %v2664, 4
      %v2702 = vsel %vm961, %v2701, %v2652
      %v2703 = vrot.slane %v2652, 4
      %v2704 = vsel %vm961, %v2664, %v2703
      %v2706 = vunpack.c.l.s4 1934713408
      %v2707 = vunpack.c.0.s8 %v2706
      %v2708 = vperm.slane %v2702, %v2707
      %v2710 = vunpack.c.l.s4 1934713408
      %v2711 = vunpack.c.0.s8 %v2710
      %v2712 = vperm.slane %v2704, %v2711
      %v2713 = vrot.slane %v2684, 4
      %v2714 = vsel %vm961, %v2713, %v2672
      %v2715 = vrot.slane %v2672, 4
      %v2716 = vsel %vm961, %v2684, %v2715
      %v2718 = vunpack.c.l.s4 1934713408
      %v2719 = vunpack.c.0.s8 %v2718
      %v2720 = vperm.slane %v2714, %v2719
      %v2722 = vunpack.c.l.s4 1934713408
      %v2723 = vunpack.c.0.s8 %v2722
      %v2724 = vperm.slane %v2716, %v2723
      %v2725 = vrot.slane %v2688, 4
      %v2726 = vsel %vm961, %v2725, %v2676
      %v2727 = vrot.slane %v2676, 4
      %v2728 = vsel %vm961, %v2688, %v2727
      %v2730 = vunpack.c.l.s4 1934713408
      %v2731 = vunpack.c.0.s8 %v2730
      %v2732 = vperm.slane %v2726, %v2731
      %v2734 = vunpack.c.l.s4 1934713408
      %v2735 = vunpack.c.0.s8 %v2734
      %v2736 = vperm.slane %v2728, %v2735
      %v2737 = vrot.slane %v2720, 4
      %v2738 = vsel %vm961, %v2737, %v2696
      %v2739 = vrot.slane %v2696, 4
      %v2740 = vsel %vm961, %v2720, %v2739
      %v2741 = vrot.slane %v2724, 4
      %v2742 = vsel %vm961, %v2741, %v2700
      %v2743 = vrot.slane %v2700, 4
      %v2744 = vsel %vm961, %v2724, %v2743
      %v2745 = vrot.slane %v2732, 4
      %v2746 = vsel %vm961, %v2745, %v2708
      %v2747 = vrot.slane %v2708, 4
      %v2748 = vsel %vm961, %v2732, %v2747
      %v2749 = vrot.slane %v2736, 4
      %v2750 = vsel %vm961, %v2749, %v2712
      %v2751 = vrot.slane %v2712, 4
      %v2752 = vsel %vm961, %v2736, %v2751
      %2761 = vrot.lane.b32.xlu0 %v1060, 2
      %v2762 = vpop.permute.xlu0 %2761
      %2763 = vrot.lane.b32.xlu0 %v1172, 2
      %v2764 = vpop.permute.xlu0 %2763
      %2765 = vrot.lane.b32.xlu0 %v1284, 2
      %v2766 = vpop.permute.xlu0 %2765
      %2767 = vrot.lane.b32.xlu0 %v1396, 2
      %v2768 = vpop.permute.xlu0 %2767
      %2769 = vrot.lane.b32.xlu0 %v1508, 2
      %v2770 = vpop.permute.xlu0 %2769
      %2771 = vrot.lane.b32.xlu0 %v1620, 2
      %v2772 = vpop.permute.xlu0 %2771
      %2773 = vrot.lane.b32.xlu0 %v1732, 2
      %v2774 = vpop.permute.xlu0 %2773
      %2775 = vrot.lane.b32.xlu0 %v1844, 2
      %v2776 = vpop.permute.xlu0 %2775
      %2793 = vrot.lane.b32.xlu0 %v1062, 4
      %v2794 = vpop.permute.xlu0 %2793
      %2795 = vrot.lane.b32.xlu0 %v1174, 4
      %v2796 = vpop.permute.xlu0 %2795
      %2797 = vrot.lane.b32.xlu0 %v1286, 4
      %v2798 = vpop.permute.xlu0 %2797
      %2799 = vrot.lane.b32.xlu0 %v1398, 4
      %v2800 = vpop.permute.xlu0 %2799
      %2801 = vrot.lane.b32.xlu0 %v1510, 4
      %v2802 = vpop.permute.xlu0 %2801
      %2803 = vrot.lane.b32.xlu0 %v1622, 4
      %v2804 = vpop.permute.xlu0 %2803
      %2805 = vrot.lane.b32.xlu0 %v1734, 4
      %v2806 = vpop.permute.xlu0 %2805
      %2807 = vrot.lane.b32.xlu0 %v1846, 4
      %v2808 = vpop.permute.xlu0 %2807
      %2825 = vrot.lane.b32.xlu0 %v1064, 6
      %v2826 = vpop.permute.xlu0 %2825
      %2827 = vrot.lane.b32.xlu0 %v1176, 6
      %v2828 = vpop.permute.xlu0 %2827
      %2829 = vrot.lane.b32.xlu0 %v1288, 6
      %v2830 = vpop.permute.xlu0 %2829
      %2831 = vrot.lane.b32.xlu0 %v1400, 6
      %v2832 = vpop.permute.xlu0 %2831
      %2833 = vrot.lane.b32.xlu0 %v1512, 6
      %v2834 = vpop.permute.xlu0 %2833
      %2835 = vrot.lane.b32.xlu0 %v1624, 6
      %v2836 = vpop.permute.xlu0 %2835
      %2837 = vrot.lane.b32.xlu0 %v1736, 6
      %v2838 = vpop.permute.xlu0 %2837
      %2839 = vrot.lane.b32.xlu0 %v1848, 6
      %v2840 = vpop.permute.xlu0 %2839
      %2857 = vrot.lane.b32.xlu0 %v1066, 8
      %v2858 = vpop.permute.xlu0 %2857
      %2859 = vrot.lane.b32.xlu0 %v1178, 8
      %v2860 = vpop.permute.xlu0 %2859
      %2861 = vrot.lane.b32.xlu0 %v1290, 8
      %v2862 = vpop.permute.xlu0 %2861
      %2863 = vrot.lane.b32.xlu0 %v1402, 8
      %v2864 = vpop.permute.xlu0 %2863
      %2865 = vrot.lane.b32.xlu0 %v1514, 8
      %v2866 = vpop.permute.xlu0 %2865
      %2867 = vrot.lane.b32.xlu0 %v1626, 8
      %v2868 = vpop.permute.xlu0 %2867
      %2869 = vrot.lane.b32.xlu0 %v1738, 8
      %v2870 = vpop.permute.xlu0 %2869
      %2871 = vrot.lane.b32.xlu0 %v1850, 8
      %v2872 = vpop.permute.xlu0 %2871
      %2889 = vrot.lane.b32.xlu0 %v1068, 10
      %v2890 = vpop.permute.xlu0 %2889
      %2891 = vrot.lane.b32.xlu0 %v1180, 10
      %v2892 = vpop.permute.xlu0 %2891
      %2893 = vrot.lane.b32.xlu0 %v1292, 10
      %v2894 = vpop.permute.xlu0 %2893
      %2895 = vrot.lane.b32.xlu0 %v1404, 10
      %v2896 = vpop.permute.xlu0 %2895
      %2897 = vrot.lane.b32.xlu0 %v1516, 10
      %v2898 = vpop.permute.xlu0 %2897
      %2899 = vrot.lane.b32.xlu0 %v1628, 10
      %v2900 = vpop.permute.xlu0 %2899
      %2901 = vrot.lane.b32.xlu0 %v1740, 10
      %v2902 = vpop.permute.xlu0 %2901
      %2903 = vrot.lane.b32.xlu0 %v1852, 10
      %v2904 = vpop.permute.xlu0 %2903
      %2921 = vrot.lane.b32.xlu0 %v1070, 12
      %v2922 = vpop.permute.xlu0 %2921
      %2923 = vrot.lane.b32.xlu0 %v1182, 12
      %v2924 = vpop.permute.xlu0 %2923
      %2925 = vrot.lane.b32.xlu0 %v1294, 12
      %v2926 = vpop.permute.xlu0 %2925
      %2927 = vrot.lane.b32.xlu0 %v1406, 12
      %v2928 = vpop.permute.xlu0 %2927
      %2929 = vrot.lane.b32.xlu0 %v1518, 12
      %v2930 = vpop.permute.xlu0 %2929
      %2931 = vrot.lane.b32.xlu0 %v1630, 12
      %v2932 = vpop.permute.xlu0 %2931
      %2933 = vrot.lane.b32.xlu0 %v1742, 12
      %v2934 = vpop.permute.xlu0 %2933
      %2935 = vrot.lane.b32.xlu0 %v1854, 12
      %v2936 = vpop.permute.xlu0 %2935
      %2953 = vrot.lane.b32.xlu0 %v1072, 14
      %v2954 = vpop.permute.xlu0 %2953
      %2955 = vrot.lane.b32.xlu0 %v1184, 14
      %v2956 = vpop.permute.xlu0 %2955
      %2957 = vrot.lane.b32.xlu0 %v1296, 14
      %v2958 = vpop.permute.xlu0 %2957
      %2959 = vrot.lane.b32.xlu0 %v1408, 14
      %v2960 = vpop.permute.xlu0 %2959
      %2961 = vrot.lane.b32.xlu0 %v1520, 14
      %v2962 = vpop.permute.xlu0 %2961
      %2963 = vrot.lane.b32.xlu0 %v1632, 14
      %v2964 = vpop.permute.xlu0 %2963
      %2965 = vrot.lane.b32.xlu0 %v1744, 14
      %v2966 = vpop.permute.xlu0 %2965
      %2967 = vrot.lane.b32.xlu0 %v1856, 14
      %v2968 = vpop.permute.xlu0 %2967
      %2985 = vrot.lane.b32.xlu0 %v1954, 16
      %v2986 = vpop.permute.xlu0 %2985
      %2987 = vrot.lane.b32.xlu0 %v2066, 16
      %v2988 = vpop.permute.xlu0 %2987
      %2989 = vrot.lane.b32.xlu0 %v2178, 16
      %v2990 = vpop.permute.xlu0 %2989
      %2991 = vrot.lane.b32.xlu0 %v2290, 16
      %v2992 = vpop.permute.xlu0 %2991
      %2993 = vrot.lane.b32.xlu0 %v2402, 16
      %v2994 = vpop.permute.xlu0 %2993
      %2995 = vrot.lane.b32.xlu0 %v2514, 16
      %v2996 = vpop.permute.xlu0 %2995
      %2997 = vrot.lane.b32.xlu0 %v2626, 16
      %v2998 = vpop.permute.xlu0 %2997
      %2999 = vrot.lane.b32.xlu0 %v2738, 16
      %v3000 = vpop.permute.xlu0 %2999
      %3017 = vrot.lane.b32.xlu0 %v1956, 18
      %v3018 = vpop.permute.xlu0 %3017
      %3019 = vrot.lane.b32.xlu0 %v2068, 18
      %v3020 = vpop.permute.xlu0 %3019
      %3021 = vrot.lane.b32.xlu0 %v2180, 18
      %v3022 = vpop.permute.xlu0 %3021
      %3023 = vrot.lane.b32.xlu0 %v2292, 18
      %v3024 = vpop.permute.xlu0 %3023
      %3025 = vrot.lane.b32.xlu0 %v2404, 18
      %v3026 = vpop.permute.xlu0 %3025
      %3027 = vrot.lane.b32.xlu0 %v2516, 18
      %v3028 = vpop.permute.xlu0 %3027
      %3029 = vrot.lane.b32.xlu0 %v2628, 18
      %v3030 = vpop.permute.xlu0 %3029
      %3031 = vrot.lane.b32.xlu0 %v2740, 18
      %v3032 = vpop.permute.xlu0 %3031
      %3049 = vrot.lane.b32.xlu0 %v1958, 20
      %v3050 = vpop.permute.xlu0 %3049
      %3051 = vrot.lane.b32.xlu0 %v2070, 20
      %v3052 = vpop.permute.xlu0 %3051
      %3053 = vrot.lane.b32.xlu0 %v2182, 20
      %v3054 = vpop.permute.xlu0 %3053
      %3055 = vrot.lane.b32.xlu0 %v2294, 20
      %v3056 = vpop.permute.xlu0 %3055
      %3057 = vrot.lane.b32.xlu0 %v2406, 20
      %v3058 = vpop.permute.xlu0 %3057
      %3059 = vrot.lane.b32.xlu0 %v2518, 20
      %v3060 = vpop.permute.xlu0 %3059
      %3061 = vrot.lane.b32.xlu0 %v2630, 20
      %v3062 = vpop.permute.xlu0 %3061
      %3063 = vrot.lane.b32.xlu0 %v2742, 20
      %v3064 = vpop.permute.xlu0 %3063
      %3081 = vrot.lane.b32.xlu0 %v1960, 22
      %v3082 = vpop.permute.xlu0 %3081
      %3083 = vrot.lane.b32.xlu0 %v2072, 22
      %v3084 = vpop.permute.xlu0 %3083
      %3085 = vrot.lane.b32.xlu0 %v2184, 22
      %v3086 = vpop.permute.xlu0 %3085
      %3087 = vrot.lane.b32.xlu0 %v2296, 22
      %v3088 = vpop.permute.xlu0 %3087
      %3089 = vrot.lane.b32.xlu0 %v2408, 22
      %v3090 = vpop.permute.xlu0 %3089
      %3091 = vrot.lane.b32.xlu0 %v2520, 22
      %v3092 = vpop.permute.xlu0 %3091
      %3093 = vrot.lane.b32.xlu0 %v2632, 22
      %v3094 = vpop.permute.xlu0 %3093
      %3095 = vrot.lane.b32.xlu0 %v2744, 22
      %v3096 = vpop.permute.xlu0 %3095
      %3113 = vrot.lane.b32.xlu0 %v1962, 24
      %v3114 = vpop.permute.xlu0 %3113
      %3115 = vrot.lane.b32.xlu0 %v2074, 24
      %v3116 = vpop.permute.xlu0 %3115
      %3117 = vrot.lane.b32.xlu0 %v2186, 24
      %v3118 = vpop.permute.xlu0 %3117
      %3119 = vrot.lane.b32.xlu0 %v2298, 24
      %v3120 = vpop.permute.xlu0 %3119
      %3121 = vrot.lane.b32.xlu0 %v2410, 24
      %v3122 = vpop.permute.xlu0 %3121
      %3123 = vrot.lane.b32.xlu0 %v2522, 24
      %v3124 = vpop.permute.xlu0 %3123
      %3125 = vrot.lane.b32.xlu0 %v2634, 24
      %v3126 = vpop.permute.xlu0 %3125
      %3127 = vrot.lane.b32.xlu0 %v2746, 24
      %v3128 = vpop.permute.xlu0 %3127
      %3145 = vrot.lane.b32.xlu0 %v1964, 26
      %v3146 = vpop.permute.xlu0 %3145
      %3147 = vrot.lane.b32.xlu0 %v2076, 26
      %v3148 = vpop.permute.xlu0 %3147
      %3149 = vrot.lane.b32.xlu0 %v2188, 26
      %v3150 = vpop.permute.xlu0 %3149
      %3151 = vrot.lane.b32.xlu0 %v2300, 26
      %v3152 = vpop.permute.xlu0 %3151
      %3153 = vrot.lane.b32.xlu0 %v2412, 26
      %v3154 = vpop.permute.xlu0 %3153
      %3155 = vrot.lane.b32.xlu0 %v2524, 26
      %v3156 = vpop.permute.xlu0 %3155
      %3157 = vrot.lane.b32.xlu0 %v2636, 26
      %v3158 = vpop.permute.xlu0 %3157
      %3159 = vrot.lane.b32.xlu0 %v2748, 26
      %v3160 = vpop.permute.xlu0 %3159
      %3177 = vrot.lane.b32.xlu0 %v1966, 28
      %v3178 = vpop.permute.xlu0 %3177
      %3179 = vrot.lane.b32.xlu0 %v2078, 28
      %v3180 = vpop.permute.xlu0 %3179
      %3181 = vrot.lane.b32.xlu0 %v2190, 28
      %v3182 = vpop.permute.xlu0 %3181
      %3183 = vrot.lane.b32.xlu0 %v2302, 28
      %v3184 = vpop.permute.xlu0 %3183
      %3185 = vrot.lane.b32.xlu0 %v2414, 28
      %v3186 = vpop.permute.xlu0 %3185
      %3187 = vrot.lane.b32.xlu0 %v2526, 28
      %v3188 = vpop.permute.xlu0 %3187
      %3189 = vrot.lane.b32.xlu0 %v2638, 28
      %v3190 = vpop.permute.xlu0 %3189
      %3191 = vrot.lane.b32.xlu0 %v2750, 28
      %v3192 = vpop.permute.xlu0 %3191
      %3209 = vrot.lane.b32.xlu0 %v1968, 30
      %v3210 = vpop.permute.xlu0 %3209
      %3211 = vrot.lane.b32.xlu0 %v2080, 30
      %v3212 = vpop.permute.xlu0 %3211
      %3213 = vrot.lane.b32.xlu0 %v2192, 30
      %v3214 = vpop.permute.xlu0 %3213
      %3215 = vrot.lane.b32.xlu0 %v2304, 30
      %v3216 = vpop.permute.xlu0 %3215
      %3217 = vrot.lane.b32.xlu0 %v2416, 30
      %v3218 = vpop.permute.xlu0 %3217
      %3219 = vrot.lane.b32.xlu0 %v2528, 30
      %v3220 = vpop.permute.xlu0 %3219
      %3221 = vrot.lane.b32.xlu0 %v2640, 30
      %v3222 = vpop.permute.xlu0 %3221
      %3223 = vrot.lane.b32.xlu0 %v2752, 30
      %v3224 = vpop.permute.xlu0 %3223
      %vm3233 = vcmask 15360
      %v3234 = vsel %vm3233, %v1058, %v2762
      %v3235 = vsel %vm3233, %v1170, %v2764
      %v3236 = vsel %vm3233, %v1282, %v2766
      %v3237 = vsel %vm3233, %v1394, %v2768
      %v3238 = vsel %vm3233, %v1506, %v2770
      %v3239 = vsel %vm3233, %v1618, %v2772
      %v3240 = vsel %vm3233, %v1730, %v2774
      %v3241 = vsel %vm3233, %v1842, %v2776
      %vm3242 = vcmask 31744
      %v3243 = vsel %vm3242, %v3234, %v2794
      %v3244 = vsel %vm3242, %v3235, %v2796
      %v3245 = vsel %vm3242, %v3236, %v2798
      %v3246 = vsel %vm3242, %v3237, %v2800
      %v3247 = vsel %vm3242, %v3238, %v2802
      %v3248 = vsel %vm3242, %v3239, %v2804
      %v3249 = vsel %vm3242, %v3240, %v2806
      %v3250 = vsel %vm3242, %v3241, %v2808
      %vm3251 = vcmask 48128
      %v3252 = vsel %vm3251, %v3243, %v2826
      %v3253 = vsel %vm3251, %v3244, %v2828
      %v3254 = vsel %vm3251, %v3245, %v2830
      %v3255 = vsel %vm3251, %v3246, %v2832
      %v3256 = vsel %vm3251, %v3247, %v2834
      %v3257 = vsel %vm3251, %v3248, %v2836
      %v3258 = vsel %vm3251, %v3249, %v2838
      %v3259 = vsel %vm3251, %v3250, %v2840
      %vm3260 = vcmask 64512
      %v3261 = vsel %vm3260, %v3252, %v2858
      %v3262 = vsel %vm3260, %v3253, %v2860
      %v3263 = vsel %vm3260, %v3254, %v2862
      %v3264 = vsel %vm3260, %v3255, %v2864
      %v3265 = vsel %vm3260, %v3256, %v2866
      %v3266 = vsel %vm3260, %v3257, %v2868
      %v3267 = vsel %vm3260, %v3258, %v2870
      %v3268 = vsel %vm3260, %v3259, %v2872
      %vm3269 = vcmask 80896
      %v3270 = vsel %vm3269, %v3261, %v2890
      %v3271 = vsel %vm3269, %v3262, %v2892
      %v3272 = vsel %vm3269, %v3263, %v2894
      %v3273 = vsel %vm3269, %v3264, %v2896
      %v3274 = vsel %vm3269, %v3265, %v2898
      %v3275 = vsel %vm3269, %v3266, %v2900
      %v3276 = vsel %vm3269, %v3267, %v2902
      %v3277 = vsel %vm3269, %v3268, %v2904
      %vm3278 = vcmask 97280
      %v3279 = vsel %vm3278, %v3270, %v2922
      %v3280 = vsel %vm3278, %v3271, %v2924
      %v3281 = vsel %vm3278, %v3272, %v2926
      %v3282 = vsel %vm3278, %v3273, %v2928
      %v3283 = vsel %vm3278, %v3274, %v2930
      %v3284 = vsel %vm3278, %v3275, %v2932
      %v3285 = vsel %vm3278, %v3276, %v2934
      %v3286 = vsel %vm3278, %v3277, %v2936
      %vm3287 = vcmask 113664
      %v3288 = vsel %vm3287, %v3279, %v2954
      %v3289 = vsel %vm3287, %v3280, %v2956
      %v3290 = vsel %vm3287, %v3281, %v2958
      %v3291 = vsel %vm3287, %v3282, %v2960
      %v3292 = vsel %vm3287, %v3283, %v2962
      %v3293 = vsel %vm3287, %v3284, %v2964
      %v3294 = vsel %vm3287, %v3285, %v2966
      %v3295 = vsel %vm3287, %v3286, %v2968
      %vm3296 = vcmask 130048
      %v3297 = vsel %vm3296, %v3288, %v2986
      %v3298 = vsel %vm3296, %v3289, %v2988
      %v3299 = vsel %vm3296, %v3290, %v2990
      %v3300 = vsel %vm3296, %v3291, %v2992
      %v3301 = vsel %vm3296, %v3292, %v2994
      %v3302 = vsel %vm3296, %v3293, %v2996
      %v3303 = vsel %vm3296, %v3294, %v2998
      %v3304 = vsel %vm3296, %v3295, %v3000
      %vm3305 = vcmask 146432
      %v3306 = vsel %vm3305, %v3297, %v3018
      %v3307 = vsel %vm3305, %v3298, %v3020
      %v3308 = vsel %vm3305, %v3299, %v3022
      %v3309 = vsel %vm3305, %v3300, %v3024
      %v3310 = vsel %vm3305, %v3301, %v3026
      %v3311 = vsel %vm3305, %v3302, %v3028
      %v3312 = vsel %vm3305, %v3303, %v3030
      %v3313 = vsel %vm3305, %v3304, %v3032
      %vm3314 = vcmask 162816
      %v3315 = vsel %vm3314, %v3306, %v3050
      %v3316 = vsel %vm3314, %v3307, %v3052
      %v3317 = vsel %vm3314, %v3308, %v3054
      %v3318 = vsel %vm3314, %v3309, %v3056
      %v3319 = vsel %vm3314, %v3310, %v3058
      %v3320 = vsel %vm3314, %v3311, %v3060
      %v3321 = vsel %vm3314, %v3312, %v3062
      %v3322 = vsel %vm3314, %v3313, %v3064
      %vm3323 = vcmask 179200
      %v3324 = vsel %vm3323, %v3315, %v3082
      %v3325 = vsel %vm3323, %v3316, %v3084
      %v3326 = vsel %vm3323, %v3317, %v3086
      %v3327 = vsel %vm3323, %v3318, %v3088
      %v3328 = vsel %vm3323, %v3319, %v3090
      %v3329 = vsel %vm3323, %v3320, %v3092
      %v3330 = vsel %vm3323, %v3321, %v3094
      %v3331 = vsel %vm3323, %v3322, %v3096
      %vm3332 = vcmask 195584
      %v3333 = vsel %vm3332, %v3324, %v3114
      %v3334 = vsel %vm3332, %v3325, %v3116
      %v3335 = vsel %vm3332, %v3326, %v3118
      %v3336 = vsel %vm3332, %v3327, %v3120
      %v3337 = vsel %vm3332, %v3328, %v3122
      %v3338 = vsel %vm3332, %v3329, %v3124
      %v3339 = vsel %vm3332, %v3330, %v3126
      %v3340 = vsel %vm3332, %v3331, %v3128
      %vm3341 = vcmask 211968
      %v3342 = vsel %vm3341, %v3333, %v3146
      %v3343 = vsel %vm3341, %v3334, %v3148
      %v3344 = vsel %vm3341, %v3335, %v3150
      %v3345 = vsel %vm3341, %v3336, %v3152
      %v3346 = vsel %vm3341, %v3337, %v3154
      %v3347 = vsel %vm3341, %v3338, %v3156
      %v3348 = vsel %vm3341, %v3339, %v3158
      %v3349 = vsel %vm3341, %v3340, %v3160
      %vm3350 = vcmask 228352
      %v3351 = vsel %vm3350, %v3342, %v3178
      %v3352 = vsel %vm3350, %v3343, %v3180
      %v3353 = vsel %vm3350, %v3344, %v3182
      %v3354 = vsel %vm3350, %v3345, %v3184
      %v3355 = vsel %vm3350, %v3346, %v3186
      %v3356 = vsel %vm3350, %v3347, %v3188
      %v3357 = vsel %vm3350, %v3348, %v3190
      %v3358 = vsel %vm3350, %v3349, %v3192
      %vm3359 = vcmask 244736
      %v3360 = vsel %vm3359, %v3351, %v3210
      %v3361 = vsel %vm3359, %v3352, %v3212
      %v3362 = vsel %vm3359, %v3353, %v3214
      %v3363 = vsel %vm3359, %v3354, %v3216
      %v3364 = vsel %vm3359, %v3355, %v3218
      %v3365 = vsel %vm3359, %v3356, %v3220
      %v3366 = vsel %vm3359, %v3357, %v3222
      %v3367 = vsel %vm3359, %v3358, %v3224
      %3376 = vrot.lane.b32.xlu0 %v3360, 32
      %v3377 = vpop.permute.xlu0 %3376
      %3378 = vrot.lane.b32.xlu0 %v3361, 32
      %v3379 = vpop.permute.xlu0 %3378
      %3380 = vrot.lane.b32.xlu0 %v3362, 32
      %v3381 = vpop.permute.xlu0 %3380
      %3382 = vrot.lane.b32.xlu0 %v3363, 32
      %v3383 = vpop.permute.xlu0 %3382
      %3384 = vrot.lane.b32.xlu0 %v3364, 32
      %v3385 = vpop.permute.xlu0 %3384
      %3386 = vrot.lane.b32.xlu0 %v3365, 32
      %v3387 = vpop.permute.xlu0 %3386
      %3388 = vrot.lane.b32.xlu0 %v3366, 32
      %v3389 = vpop.permute.xlu0 %3388
      %3390 = vrot.lane.b32.xlu0 %v3367, 32
      %v3391 = vpop.permute.xlu0 %3390
      %vm3400 = vcmask 261120
      %v3401 = vsel %vm3400, %v3360, %v3377
      %v3402 = vsel %vm3400, %v3361, %v3379
      %v3403 = vsel %vm3400, %v3362, %v3381
      %v3404 = vsel %vm3400, %v3363, %v3383
      %v3405 = vsel %vm3400, %v3364, %v3385
      %v3406 = vsel %vm3400, %v3365, %v3387
      %v3407 = vsel %vm3400, %v3366, %v3389
      %v3408 = vsel %vm3400, %v3367, %v3391
      %vm3409 = vcmask 523264
      %3410 = vst.msk [vmem:[%s118] sm:$0xff] %vm3409, %v3401
      %3411 = vst.msk [vmem:[%s118 + $0x8] sm:$0xff] %vm3409, %v3402
      %3412 = vst.msk [vmem:[%s118 + $0x10] sm:$0xff] %vm3409, %v3403
      %3413 = vst.msk [vmem:[%s118 + $0x18] sm:$0xff] %vm3409, %v3404
      %3414 = vst.msk [vmem:[%s118 + $0x20] sm:$0xff] %vm3409, %v3405
      %3415 = vst.msk [vmem:[%s118 + $0x28] sm:$0xff] %vm3409, %v3406
      %3416 = vst.msk [vmem:[%s118 + $0x30] sm:$0xff] %vm3409, %v3407
      %3417 = vst.msk [vmem:[%s118 + $0x38] sm:$0xff] %vm3409, %v3408
      %s3418 = smul.u32 8, %s12
      %p3419 = scmp.lt.s32.totalorder %s3418, 15
      %s3420 = scalar_select %p3419, %s3418, 15
      %s3421 = smul.addr %s3420, 8
      %s3422 = scalar_lea.vmem %s1, %s3421
      // Predicated region
      $region25: #{tpu_custom_call.1} parent=23 // pred_check
        %p3423 = pneg %p56
      $region26: #{tpu_custom_call.1} parent=23 // pred_check_branch
        %3425 = sbr.rel (%p3423) target = $region28
      $region27: #{tpu_custom_call.1} parent=23 // pred_region
        %s3426 = smul.u32 8, %s12
      $region28: #{tpu_custom_call.1} parent=23 // pred_fallthru
        _
    $region24: #{tpu_custom_call.1} parent=5 // pred_fallthru
      _
    %p3427 = scmp.le.s32.totalorder 2, %s7
    // Predicated region
    $region29: #{tpu_custom_call.1} parent=5 // pred_check
      %p3428 = pneg %p3427
    $region30: #{tpu_custom_call.1} parent=5 // pred_check_branch
      %3430 = sbr.rel (%p3428) target = $region32
    $region31: #{tpu_custom_call.1} parent=5 // pred_region
      %s3431 = ssub.s32 %s7, 2
      // Predicated region
      $region33: #{tpu_custom_call.1} parent=31 // pred_check
        %p3432 = pneg %p62
      $region34: #{tpu_custom_call.1} parent=31 // pred_check_branch
        %3434 = sbr.rel (%p3432) target = $region36
      $region35: #{tpu_custom_call.1} parent=31 // pred_region
        %s3435 = smul.u32 8, %s13
        %p3436 = scmp.lt.s32.totalorder %s3435, 15
        %s3437 = scalar_select %p3436, %s3435, 15
        %s3438 = smul.addr %s3437, 8
        %s3439 = scalar_lea.vmem %s1, %s3438
      $region36: #{tpu_custom_call.1} parent=31 // pred_fallthru
        _
    $region32: #{tpu_custom_call.1} parent=5 // pred_fallthru
      _
  $region6: #{tpu_custom_call.1} parent=0 // loop_footer
    %s11 = sadd.s32 1, %s7
  $region7: #{tpu_custom_call.1} parent=0 // loop_footer_branch
    %6 = sbr.rel target = $region3
  $region8: #{tpu_custom_call.1} parent=0 // loop_exit
    _

</llo_original>
